<compile_context>
chip_gen: v5e
topology: v5e:2x2
jax: 0.10.0
libtpu: 0.0.40
codegen_flags: <defaults>
</compile_context>

<pallas_src>
import functools
from typing import NamedTuple

import jax
import jax.numpy as jnp
from jax.experimental import pallas as pl
from jax.experimental.pallas import tpu as pltpu


LANE = 128       # vreg lane width
SUBLANE = 8      # f32 sublane granularity
NEG_BIG = -1e30  # fill value for padded vocab logits


class DecoderDims(NamedTuple):
    output_dim: int
    emb_dim: int
    hid_dim: int
    n_layers: int
    batch: int
    Vp: int   # vocab padded to 128 lanes
    Ep: int   # emb_dim padded to 128 lanes
    Hp: int   # hid_dim padded to 128 lanes
    Bp: int   # batch padded to 8 sublanes
    TN: int   # fc_out vocab tile width


def _round_up(x, m):
    return ((x + m - 1) // m) * m


def make_dims(output_dim, emb_dim, hid_dim, n_layers, batch):
    Vp = _round_up(output_dim, LANE)
    # Vocab tile for fc_out: largest of {512, 256, 128} dividing Vp so fc_w
    # streams through VMEM in pipelined blocks instead of being resident.
    TN = next(t for t in (512, 256, 128) if Vp % t == 0)
    return DecoderDims(
        output_dim=output_dim, emb_dim=emb_dim, hid_dim=hid_dim,
        n_layers=n_layers, batch=batch,
        Vp=Vp,
        Ep=_round_up(emb_dim, LANE),
        Hp=_round_up(hid_dim, LANE),
        Bp=_round_up(max(batch, SUBLANE), SUBLANE),
        TN=TN,
    )


# -----------------------------------------------------------------------------
# Fused Pallas kernel: DMA-gather embed -> n_layers GRU cells -> tiled fc_out
# -----------------------------------------------------------------------------
def _decoder_step_kernel(ids_ref, hid_in_ref, emb_hbm_ref, *rest,
                         n_layers, hid_pad):
    """One decode step.

    Ref order (PrefetchScalarGridSpec):
      ids_ref                               scalar prefetch, SMEM, (Bp,) int32
      hid_in_ref                            (L, Bp, Hp) f32, VMEM (resident)
      emb_hbm_ref                           (Vp, Ep) f32, HBM (pl.ANY)
      per layer: w_ih (in_p, 3Hp) bf16, w_hh (Hp, 3Hp) bf16,
                 b_ih (1, 3Hp) f32,    b_hh (1, 3Hp) f32
      fc_w_ref (Hp, TN) bf16 tile, fc_b_ref (1, TN) f32 tile
      outputs: pred_ref (Bp, TN) tile, hid_out_ref (L, Bp, Hp)
      scratch: emb_scr (Bp, Ep) f32, x_scr (Bp, Hp) bf16, gather_sem DMA (Bp,)
    """
    layer_refs = rest[:4 * n_layers]
    (fc_w_ref, fc_b_ref, pred_ref, hid_out_ref,
     emb_scr, x_scr, gather_sem) = rest[4 * n_layers:]
    Hp = hid_pad
    Bp = hid_in_ref.shape[1]
    j = pl.program_id(0)

    # Embedding gather + GRU stack run once (first vocab tile).  The top-layer
    # activation is parked in x_scr (scratch persists across grid iterations)
    # and consumed by every fc_out vocab tile.
    @pl.when(j == 0)
    def _():
        # 1) Row gather: DMA only the Bp needed embedding rows HBM -> VMEM.
        copies = []
        for b in range(Bp):
            row = ids_ref[b]
            cp = pltpu.make_async_copy(
                emb_hbm_ref.at[pl.ds(row, 1)],   # (1, Ep) slice in HBM
                emb_scr.at[pl.ds(b, 1)],         # (1, Ep) slice in VMEM
                gather_sem.at[b])
            cp.start()
            copies.append(cp)
        for cp in copies:
            cp.wait()

        # 2) GRU stack (PyTorch gate order r, z, n).  Weights bf16, all
        #    accumulation and elementwise gate math in f32.  Gate blocks are
        #    Hp-wide and 128-lane aligned, so every slice is lane-dense.
        x = emb_scr[...].astype(jnp.bfloat16)                      # (Bp, Ep)
        for layer in range(n_layers):
            w_ih = layer_refs[4 * layer][...]                      # (in_p, 3Hp)
            w_hh = layer_refs[4 * layer + 1][...]                  # (Hp,  3Hp)
            b_ih = layer_refs[4 * layer + 2][...]                  # (1, 3Hp)
            b_hh = layer_refs[4 * layer + 3][...]                  # (1, 3Hp)
            h = hid_in_ref[layer]                                  # (Bp, Hp) f32
            gi = jnp.dot(x, w_ih, preferred_element_type=jnp.float32) + b_ih
            gh = jnp.dot(h.astype(jnp.bfloat16), w_hh,
                         preferred_element_type=jnp.float32) + b_hh
            r = jax.nn.sigmoid(gi[:, 0:Hp] + gh[:, 0:Hp])
            z = jax.nn.sigmoid(gi[:, Hp:2 * Hp] + gh[:, Hp:2 * Hp])
            n = jnp.tanh(gi[:, 2 * Hp:3 * Hp] + r * gh[:, 2 * Hp:3 * Hp])
            h_new = (1.0 - z) * n + z * h                          # f32
            # hid_in/hid_out are separate VMEM blocks (HBM-aliased only), and
            # h is fully read before this per-layer store.
            hid_out_ref[layer] = h_new
            x = h_new.astype(jnp.bfloat16)
        x_scr[...] = x                                             # (Bp, Hp)

    # 3) fc_out for this vocab tile: fc_w streamed in (Hp, TN) bf16 blocks,
    #    lane-dense (Bp, TN) f32 store.
    pred_ref[...] = (jnp.dot(x_scr[...], fc_w_ref[...],
                             preferred_element_type=jnp.float32)
                     + fc_b_ref[...])


def _full_block_spec(shape):
    """Whole-array VMEM block, resident across the (1-D) vocab-tile grid."""
    rank = len(shape)

    def idx(j, ids):
        del j, ids
        return (0,) * rank

    return pl.BlockSpec(shape, idx)


@functools.partial(jax.jit, static_argnames=("dims",))
def decoder_forward(packed, input_ids, hidden_padded, encoder_outputs, *, dims):
    """Matches Decoder.forward.

    input_ids: (B,) int tokens; hidden_padded: (L, Bp, Hp) f32, zero-padded
    lanes.  encoder_outputs is accepted but unused, exactly as in the PyTorch
    module.  Returns (prediction (B, output_dim), new hidden in padded
    (L, Bp, Hp) layout, ready for the next decode step).
    """
    del encoder_outputs  # unused by the reference forward pass
    L, Bp, Hp, Ep, Vp, TN = (dims.n_layers, dims.Bp, dims.Hp, dims.Ep,
                             dims.Vp, dims.TN)
    B = input_ids.shape[0]

    # Token ids live in SMEM via scalar prefetch.  Pad rows reuse token 0 so
    # the gather is a static Bp-long unrolled DMA loop (pad rows are
    # independent and sliced off; they keep the padded buffers NaN-free).
    ids_p = jnp.zeros((Bp,), jnp.int32).at[:B].set(input_ids.astype(jnp.int32))

    layer_args, layer_specs = [], []
    for l in range(L):
        for name in (f"w_ih_{l}", f"w_hh_{l}", f"b_ih_{l}", f"b_hh_{l}"):
            arr = packed[name]
            layer_args.append(arr)
            layer_specs.append(_full_block_spec(arr.shape))

    kernel = functools.partial(_decoder_step_kernel, n_layers=L, hid_pad=Hp)

    grid_spec = pltpu.PrefetchScalarGridSpec(
        num_scalar_prefetch=1,
        grid=(Vp // TN,),
        in_specs=[
            _full_block_spec((L, Bp, Hp)),               # hidden (resident)
            pl.BlockSpec(memory_space=pl.ANY),           # embedding stays HBM
            *layer_specs,                                # GRU weights/biases
            pl.BlockSpec((Hp, TN), lambda j, ids: (0, j)),   # fc_w tile
            pl.BlockSpec((1, TN), lambda j, ids: (0, j)),    # fc_b tile
        ],
        out_specs=(
            pl.BlockSpec((Bp, TN), lambda j, ids: (0, j)),   # pred tile
            _full_block_spec((L, Bp, Hp)),                   # new hidden
        ),
        scratch_shapes=[
            pltpu.VMEM((Bp, Ep), jnp.float32),     # gathered embedding rows
            pltpu.VMEM((Bp, Hp), jnp.bfloat16),    # top-layer activation
            pltpu.SemaphoreType.DMA((Bp,)),        # one sem per gathered row
        ],
    )

    pred_p, hid_out_p = pl.pallas_call(
        kernel,
        out_shape=(jax.ShapeDtypeStruct((Bp, Vp), jnp.float32),
                   jax.ShapeDtypeStruct((L, Bp, Hp), jnp.float32)),
        grid_spec=grid_spec,
        # Vocab tiles must run sequentially: tile 0 computes the GRU state
        # consumed from scratch by the later tiles.
        compiler_params=pltpu.CompilerParams(
            dimension_semantics=("arbitrary",)),
        # Reuse the incoming padded hidden-state HBM buffer for the new hidden
        # state.  Index 1 counts the scalar-prefetch ids operand at index 0.
        input_output_aliases={1: 1},
    )(ids_p, hidden_padded, packed["embedding"], *layer_args,
      packed["fc_w"], packed["fc_b"])

    prediction = pred_p[:B, :dims.output_dim]
    return prediction, hid_out_p


# -----------------------------------------------------------------------------
# Parameter setup (reference layout) + packing into the fused-kernel layout
# -----------------------------------------------------------------------------
def init_decoder_params(key, output_dim, emb_dim, hid_dim, n_layers):
    """Reference (unpadded) params, PyTorch gate order [r | z | n], stored
    transposed vs torch: w_ih (in_dim, 3H), w_hh (H, 3H), biases (1, 3H)."""
    params = {}
    keys = jax.random.split(key, 2 + 4 * n_layers)
    ki = iter(keys)
    params["embedding"] = 0.1 * jax.random.normal(
        next(ki), (output_dim, emb_dim), jnp.float32)
    params["fc_w"] = 0.1 * jax.random.normal(
        next(ki), (hid_dim, output_dim), jnp.float32)
    params["fc_b"] = jnp.zeros((1, output_dim), jnp.float32)
    for layer in range(n_layers):
        in_dim = emb_dim if layer == 0 else hid_dim
        params[f"w_ih_{layer}"] = 0.1 * jax.random.normal(
            next(ki), (in_dim, 3 * hid_dim), jnp.float32)
        params[f"w_hh_{layer}"] = 0.1 * jax.random.normal(
            next(ki), (hid_dim, 3 * hid_dim), jnp.float32)
        params[f"b_ih_{layer}"] = 0.01 * jax.random.normal(
            next(ki), (1, 3 * hid_dim), jnp.float32)
        params[f"b_hh_{layer}"] = 0.01 * jax.random.normal(
            next(ki), (1, 3 * hid_dim), jnp.float32)
    return params


def pack_decoder_params(params, dims):
    """Pad + repack reference params into the fused-kernel layout.

    Gate blocks are Hp-wide and 128-lane aligned (pad lanes zero).  GRU weights
    and fc_w are stored bf16 (f32 accumulation in-kernel); biases, hidden state
    and the (gathered-by-row) embedding table stay f32.
    """
    H, E, V, L = dims.hid_dim, dims.emb_dim, dims.output_dim, dims.n_layers
    Hp, Ep, Vp = dims.Hp, dims.Ep, dims.Vp
    f32, bf16 = jnp.float32, jnp.bfloat16
    packed = {
        # Only Bp rows/step of the embedding move after the DMA gather, so f32
        # costs nothing per step and keeps the row DMA simple.
        "embedding": jnp.zeros((Vp, Ep), f32).at[:V, :E].set(params["embedding"]),
        "fc_w": jnp.zeros((Hp, Vp), f32).at[:H, :V].set(params["fc_w"]).astype(bf16),
        # Padded vocab lanes get a large negative bias so an argmax over the
        # padded prediction buffer can never select a pad lane.
        "fc_b": jnp.full((1, Vp), NEG_BIG, f32).at[:, :V].set(params["fc_b"]),
    }
    for l in range(L):
        in_dim = E if l == 0 else H
        in_p = Ep if l == 0 else Hp
        w_ih = jnp.zeros((in_p, 3 * Hp), f32)
        w_hh = jnp.zeros((Hp, 3 * Hp), f32)
        b_ih = jnp.zeros((1, 3 * Hp), f32)
        b_hh = jnp.zeros((1, 3 * Hp), f32)
        for g in range(3):  # gate order r, z, n; each block 128-aligned
            w_ih = w_ih.at[:in_dim, g * Hp:g * Hp + H].set(
                params[f"w_ih_{l}"][:, g * H:(g + 1) * H])
            w_hh = w_hh.at[:H, g * Hp:g * Hp + H].set(
                params[f"w_hh_{l}"][:, g * H:(g + 1) * H])
            b_ih = b_ih.at[:, g * Hp:g * Hp + H].set(
                params[f"b_ih_{l}"][:, g * H:(g + 1) * H])
            b_hh = b_hh.at[:, g * Hp:g * Hp + H].set(
                params[f"b_hh_{l}"][:, g * H:(g + 1) * H])
        packed[f"w_ih_{l}"] = w_ih.astype(bf16)
        packed[f"w_hh_{l}"] = w_hh.astype(bf16)
        packed[f"b_ih_{l}"] = b_ih
        packed[f"b_hh_{l}"] = b_hh
    return packed


def pad_hidden(hidden, dims):
    L, B, H = hidden.shape
    return jnp.zeros((L, dims.Bp, dims.Hp), jnp.float32).at[:, :B, :H].set(hidden)


def unpad_hidden(hidden_p, dims):
    return hidden_p[:, :dims.batch, :dims.hid_dim]


# -----------------------------------------------------------------------------
# Pure-JAX reference (independent of the kernel layout) for correctness check
# -----------------------------------------------------------------------------
def decoder_forward_ref(params, input_ids, hidden, encoder_outputs, *, n_layers):
    del encoder_outputs
    x = jnp.take(params["embedding"], input_ids, axis=0)
    new_hidden = []
    for layer in range(n_layers):
        h = hidden[layer]
        H = h.shape[1]
        gi = x @ params[f"w_ih_{layer}"] + params[f"b_ih_{layer}"]
        gh = h @ params[f"w_hh_{layer}"] + params[f"b_hh_{layer}"]
        r = jax.nn.sigmoid(gi[:, :H] + gh[:, :H])
        z = jax.nn.sigmoid(gi[:, H:2 * H] + gh[:, H:2 * H])
        n = jnp.tanh(gi[:, 2 * H:] + r * gh[:, 2 * H:])
        h_new = (1.0 - z) * n + z * h
        new_hidden.append(h_new)
        x = h_new
    return x @ params["fc_w"] + params["fc_b"], jnp.stack(new_hidden, axis=0)


# -----------------------------------------------------------------------------
if __name__ == "__main__":
    OUTPUT_DIM = 32   # vocab size
    EMB_DIM = 16
    HID_DIM = 32
    N_LAYERS = 2
    BATCH = 4
    SRC_LEN = 8       # only used to build the (unused) encoder_outputs

    dims = make_dims(OUTPUT_DIM, EMB_DIM, HID_DIM, N_LAYERS, BATCH)

    root = jax.random.PRNGKey(0)
    k_params, k_in, k_hid, k_enc = jax.random.split(root, 4)

    params = init_decoder_params(k_params, OUTPUT_DIM, EMB_DIM, HID_DIM, N_LAYERS)
    packed = pack_decoder_params(params, dims)

    input_ids = jax.random.randint(k_in, (BATCH,), 0, OUTPUT_DIM, jnp.int32)
    hidden = jax.random.normal(k_hid, (N_LAYERS, BATCH, HID_DIM), jnp.float32)
    encoder_outputs = jax.random.normal(k_enc, (BATCH, SRC_LEN, HID_DIM), jnp.float32)

    hidden_p = pad_hidden(hidden, dims)
    prediction, new_hidden_p = decoder_forward(
        packed, input_ids, hidden_p, encoder_outputs, dims=dims)
    prediction = jax.block_until_ready(prediction)
    new_hidden_p = jax.block_until_ready(new_hidden_p)
    new_hidden = unpad_hidden(new_hidden_p, dims)

    # Reference uses the same bf16-rounded GRU / fc_out weights the kernel
    # sees, isolating kernel semantics from the (intentional) quantization.
    def bf16_rt(x):
        return x.astype(jnp.bfloat16).astype(jnp.float32)

    params_ref = dict(params)
    params_ref["fc_w"] = bf16_rt(params["fc_w"])
    for l in range(N_LAYERS):
        params_ref[f"w_ih_{l}"] = bf16_rt(params[f"w_ih_{l}"])
        params_ref[f"w_hh_{l}"] = bf16_rt(params[f"w_hh_{l}"])
    pred_ref, hid_ref = decoder_forward_ref(
        params_ref, input_ids, hidden, encoder_outputs, n_layers=N_LAYERS)

    assert prediction.shape == (BATCH, OUTPUT_DIM)
    assert new_hidden.shape == (N_LAYERS, BATCH, HID_DIM)
    # Kernel feeds bf16 activations to the MXU (f32 accumulation); the
    # reference keeps f32 activations.  1e-2 on O(0.1-1) values still flags
    # any semantic error (those are O(1)).
    assert jnp.allclose(prediction, pred_ref, atol=1e-2, rtol=1e-2)
    assert jnp.allclose(new_hidden, hid_ref, atol=1e-2, rtol=1e-2)
    # Padded hidden LANES stay exactly zero so the padded state chains across
    # decode steps without re-padding.  (Padded batch ROWS run real math on
    # token 0 and become nonzero; they are independent and sliced off.)
    assert jnp.allclose(new_hidden_p[:, :, HID_DIM:], 0.0)

    print("KERNEL_OK")
</pallas_src>

<mosaic_0001>
module attributes {stable_mosaic.version = 11 : i64} {
  func.func @_decoder_step_kernel(%arg0: i32, %arg1: memref<8xi32, #tpu.memory_space<smem>>, %arg2: memref<2x8x128xf32, #tpu.memory_space<vmem>>, %arg3: memref<128x128xf32, #tpu.memory_space<any>>, %arg4: memref<128x384xbf16, #tpu.memory_space<vmem>>, %arg5: memref<128x384xbf16, #tpu.memory_space<vmem>>, %arg6: memref<1x384xf32, #tpu.memory_space<vmem>>, %arg7: memref<1x384xf32, #tpu.memory_space<vmem>>, %arg8: memref<128x384xbf16, #tpu.memory_space<vmem>>, %arg9: memref<128x384xbf16, #tpu.memory_space<vmem>>, %arg10: memref<1x384xf32, #tpu.memory_space<vmem>>, %arg11: memref<1x384xf32, #tpu.memory_space<vmem>>, %arg12: memref<128x128xbf16, #tpu.memory_space<vmem>>, %arg13: memref<1x128xf32, #tpu.memory_space<vmem>>, %arg14: memref<8x128xf32, #tpu.memory_space<vmem>>, %arg15: memref<2x8x128xf32, #tpu.memory_space<vmem>>, %arg16: memref<8x128xf32, #tpu.memory_space<vmem>>, %arg17: memref<8x128xbf16, #tpu.memory_space<vmem>>, %arg18: memref<8x!tpu.dma_semaphore, #tpu.memory_space<semaphore_mem>>) attributes {dimension_semantics = [#tpu.dimension_semantics<arbitrary>], iteration_bounds = array<i64: 1>, scalar_prefetch = 1 : i64, scratch_operands = 3 : i64, tpu.core_type = #tpu.core_type<tc>, window_params = [{pipeline_mode = #tpu.pipeline_mode<synchronous>, transform_indices = @transform_0, window_bounds = array<i64: 2, 8, 128>}, {}, {pipeline_mode = #tpu.pipeline_mode<synchronous>, transform_indices = @transform_2, window_bounds = array<i64: 128, 384>}, {pipeline_mode = #tpu.pipeline_mode<synchronous>, transform_indices = @transform_3, window_bounds = array<i64: 128, 384>}, {pipeline_mode = #tpu.pipeline_mode<synchronous>, transform_indices = @transform_4, window_bounds = array<i64: 1, 384>}, {pipeline_mode = #tpu.pipeline_mode<synchronous>, transform_indices = @transform_5, window_bounds = array<i64: 1, 384>}, {pipeline_mode = #tpu.pipeline_mode<synchronous>, transform_indices = @transform_6, window_bounds = array<i64: 128, 384>}, {pipeline_mode = #tpu.pipeline_mode<synchronous>, transform_indices = @transform_7, window_bounds = array<i64: 128, 384>}, {pipeline_mode = #tpu.pipeline_mode<synchronous>, transform_indices = @transform_8, window_bounds = array<i64: 1, 384>}, {pipeline_mode = #tpu.pipeline_mode<synchronous>, transform_indices = @transform_9, window_bounds = array<i64: 1, 384>}, {transform_indices = @transform_10, window_bounds = array<i64: 128, 128>}, {transform_indices = @transform_11, window_bounds = array<i64: 1, 128>}, {transform_indices = @transform_12, window_bounds = array<i64: 8, 128>}, {pipeline_mode = #tpu.pipeline_mode<synchronous>, transform_indices = @transform_13, window_bounds = array<i64: 2, 8, 128>}]} {
    %c0_i32 = arith.constant 0 : i32
    %0 = arith.cmpi eq, %arg0, %c0_i32 : i32
    %1 = arith.extui %0 : i1 to i32
    %c0_i32_0 = arith.constant 0 : i32
    %2 = arith.cmpi ne, %1, %c0_i32_0 : i32
    scf.if %2 {
      %c0_8 = arith.constant 0 : index
      %10 = memref.load %arg1[%c0_8] : memref<8xi32, #tpu.memory_space<smem>>
      %c0_i32_9 = arith.constant 0 : i32
      %c0_i32_10 = arith.constant 0 : i32
      %11 = tpu.memref_slice %arg3[%10, %c0_i32_10] : memref<128x128xf32, #tpu.memory_space<any>> -> memref<1x128xf32, #tpu.memory_space<any>>
      %c0_i32_11 = arith.constant 0 : i32
      %c0_i32_12 = arith.constant 0 : i32
      %12 = tpu.memref_slice %arg16[%c0_i32_11, %c0_i32_12] : memref<8x128xf32, #tpu.memory_space<vmem>> -> memref<1x128xf32, #tpu.memory_space<vmem>>
      %13 = tpu.memref_slice %arg18[%c0_i32_9] : memref<8x!tpu.dma_semaphore, #tpu.memory_space<semaphore_mem>> -> memref<1x!tpu.dma_semaphore, #tpu.memory_space<semaphore_mem>>
      %14 = tpu.memref_squeeze %13 : memref<1x!tpu.dma_semaphore, #tpu.memory_space<semaphore_mem>> -> memref<!tpu.dma_semaphore, #tpu.memory_space<semaphore_mem>>
      tpu.enqueue_dma source(%11 : memref<1x128xf32, #tpu.memory_space<any>>) target(%12 : memref<1x128xf32, #tpu.memory_space<vmem>>) target_semaphore(%14 : memref<!tpu.dma_semaphore, #tpu.memory_space<semaphore_mem>>)
      %c1 = arith.constant 1 : index
      %15 = memref.load %arg1[%c1] : memref<8xi32, #tpu.memory_space<smem>>
      %c1_i32 = arith.constant 1 : i32
      %c0_i32_13 = arith.constant 0 : i32
      %16 = tpu.memref_slice %arg3[%15, %c0_i32_13] : memref<128x128xf32, #tpu.memory_space<any>> -> memref<1x128xf32, #tpu.memory_space<any>>
      %c1_i32_14 = arith.constant 1 : i32
      %c0_i32_15 = arith.constant 0 : i32
      %17 = tpu.memref_slice %arg16[%c1_i32_14, %c0_i32_15] : memref<8x128xf32, #tpu.memory_space<vmem>> -> memref<1x128xf32, #tpu.memory_space<vmem>>
      %18 = tpu.memref_slice %arg18[%c1_i32] : memref<8x!tpu.dma_semaphore, #tpu.memory_space<semaphore_mem>> -> memref<1x!tpu.dma_semaphore, #tpu.memory_space<semaphore_mem>>
      %19 = tpu.memref_squeeze %18 : memref<1x!tpu.dma_semaphore, #tpu.memory_space<semaphore_mem>> -> memref<!tpu.dma_semaphore, #tpu.memory_space<semaphore_mem>>
      tpu.enqueue_dma source(%16 : memref<1x128xf32, #tpu.memory_space<any>>) target(%17 : memref<1x128xf32, #tpu.memory_space<vmem>>) target_semaphore(%19 : memref<!tpu.dma_semaphore, #tpu.memory_space<semaphore_mem>>)
      %c2 = arith.constant 2 : index
      %20 = memref.load %arg1[%c2] : memref<8xi32, #tpu.memory_space<smem>>
      %c2_i32 = arith.constant 2 : i32
      %c0_i32_16 = arith.constant 0 : i32
      %21 = tpu.memref_slice %arg3[%20, %c0_i32_16] : memref<128x128xf32, #tpu.memory_space<any>> -> memref<1x128xf32, #tpu.memory_space<any>>
      %c2_i32_17 = arith.constant 2 : i32
      %c0_i32_18 = arith.constant 0 : i32
      %22 = tpu.memref_slice %arg16[%c2_i32_17, %c0_i32_18] : memref<8x128xf32, #tpu.memory_space<vmem>> -> memref<1x128xf32, #tpu.memory_space<vmem>>
      %23 = tpu.memref_slice %arg18[%c2_i32] : memref<8x!tpu.dma_semaphore, #tpu.memory_space<semaphore_mem>> -> memref<1x!tpu.dma_semaphore, #tpu.memory_space<semaphore_mem>>
      %24 = tpu.memref_squeeze %23 : memref<1x!tpu.dma_semaphore, #tpu.memory_space<semaphore_mem>> -> memref<!tpu.dma_semaphore, #tpu.memory_space<semaphore_mem>>
      tpu.enqueue_dma source(%21 : memref<1x128xf32, #tpu.memory_space<any>>) target(%22 : memref<1x128xf32, #tpu.memory_space<vmem>>) target_semaphore(%24 : memref<!tpu.dma_semaphore, #tpu.memory_space<semaphore_mem>>)
      %c3 = arith.constant 3 : index
      %25 = memref.load %arg1[%c3] : memref<8xi32, #tpu.memory_space<smem>>
      %c3_i32 = arith.constant 3 : i32
      %c0_i32_19 = arith.constant 0 : i32
      %26 = tpu.memref_slice %arg3[%25, %c0_i32_19] : memref<128x128xf32, #tpu.memory_space<any>> -> memref<1x128xf32, #tpu.memory_space<any>>
      %c3_i32_20 = arith.constant 3 : i32
      %c0_i32_21 = arith.constant 0 : i32
      %27 = tpu.memref_slice %arg16[%c3_i32_20, %c0_i32_21] : memref<8x128xf32, #tpu.memory_space<vmem>> -> memref<1x128xf32, #tpu.memory_space<vmem>>
      %28 = tpu.memref_slice %arg18[%c3_i32] : memref<8x!tpu.dma_semaphore, #tpu.memory_space<semaphore_mem>> -> memref<1x!tpu.dma_semaphore, #tpu.memory_space<semaphore_mem>>
      %29 = tpu.memref_squeeze %28 : memref<1x!tpu.dma_semaphore, #tpu.memory_space<semaphore_mem>> -> memref<!tpu.dma_semaphore, #tpu.memory_space<semaphore_mem>>
      tpu.enqueue_dma source(%26 : memref<1x128xf32, #tpu.memory_space<any>>) target(%27 : memref<1x128xf32, #tpu.memory_space<vmem>>) target_semaphore(%29 : memref<!tpu.dma_semaphore, #tpu.memory_space<semaphore_mem>>)
      %c4 = arith.constant 4 : index
      %30 = memref.load %arg1[%c4] : memref<8xi32, #tpu.memory_space<smem>>
      %c4_i32 = arith.constant 4 : i32
      %c0_i32_22 = arith.constant 0 : i32
      %31 = tpu.memref_slice %arg3[%30, %c0_i32_22] : memref<128x128xf32, #tpu.memory_space<any>> -> memref<1x128xf32, #tpu.memory_space<any>>
      %c4_i32_23 = arith.constant 4 : i32
      %c0_i32_24 = arith.constant 0 : i32
      %32 = tpu.memref_slice %arg16[%c4_i32_23, %c0_i32_24] : memref<8x128xf32, #tpu.memory_space<vmem>> -> memref<1x128xf32, #tpu.memory_space<vmem>>
      %33 = tpu.memref_slice %arg18[%c4_i32] : memref<8x!tpu.dma_semaphore, #tpu.memory_space<semaphore_mem>> -> memref<1x!tpu.dma_semaphore, #tpu.memory_space<semaphore_mem>>
      %34 = tpu.memref_squeeze %33 : memref<1x!tpu.dma_semaphore, #tpu.memory_space<semaphore_mem>> -> memref<!tpu.dma_semaphore, #tpu.memory_space<semaphore_mem>>
      tpu.enqueue_dma source(%31 : memref<1x128xf32, #tpu.memory_space<any>>) target(%32 : memref<1x128xf32, #tpu.memory_space<vmem>>) target_semaphore(%34 : memref<!tpu.dma_semaphore, #tpu.memory_space<semaphore_mem>>)
      %c5 = arith.constant 5 : index
      %35 = memref.load %arg1[%c5] : memref<8xi32, #tpu.memory_space<smem>>
      %c5_i32 = arith.constant 5 : i32
      %c0_i32_25 = arith.constant 0 : i32
      %36 = tpu.memref_slice %arg3[%35, %c0_i32_25] : memref<128x128xf32, #tpu.memory_space<any>> -> memref<1x128xf32, #tpu.memory_space<any>>
      %c5_i32_26 = arith.constant 5 : i32
      %c0_i32_27 = arith.constant 0 : i32
      %37 = tpu.memref_slice %arg16[%c5_i32_26, %c0_i32_27] : memref<8x128xf32, #tpu.memory_space<vmem>> -> memref<1x128xf32, #tpu.memory_space<vmem>>
      %38 = tpu.memref_slice %arg18[%c5_i32] : memref<8x!tpu.dma_semaphore, #tpu.memory_space<semaphore_mem>> -> memref<1x!tpu.dma_semaphore, #tpu.memory_space<semaphore_mem>>
      %39 = tpu.memref_squeeze %38 : memref<1x!tpu.dma_semaphore, #tpu.memory_space<semaphore_mem>> -> memref<!tpu.dma_semaphore, #tpu.memory_space<semaphore_mem>>
      tpu.enqueue_dma source(%36 : memref<1x128xf32, #tpu.memory_space<any>>) target(%37 : memref<1x128xf32, #tpu.memory_space<vmem>>) target_semaphore(%39 : memref<!tpu.dma_semaphore, #tpu.memory_space<semaphore_mem>>)
      %c6 = arith.constant 6 : index
      %40 = memref.load %arg1[%c6] : memref<8xi32, #tpu.memory_space<smem>>
      %c6_i32 = arith.constant 6 : i32
      %c0_i32_28 = arith.constant 0 : i32
      %41 = tpu.memref_slice %arg3[%40, %c0_i32_28] : memref<128x128xf32, #tpu.memory_space<any>> -> memref<1x128xf32, #tpu.memory_space<any>>
      %c6_i32_29 = arith.constant 6 : i32
      %c0_i32_30 = arith.constant 0 : i32
      %42 = tpu.memref_slice %arg16[%c6_i32_29, %c0_i32_30] : memref<8x128xf32, #tpu.memory_space<vmem>> -> memref<1x128xf32, #tpu.memory_space<vmem>>
      %43 = tpu.memref_slice %arg18[%c6_i32] : memref<8x!tpu.dma_semaphore, #tpu.memory_space<semaphore_mem>> -> memref<1x!tpu.dma_semaphore, #tpu.memory_space<semaphore_mem>>
      %44 = tpu.memref_squeeze %43 : memref<1x!tpu.dma_semaphore, #tpu.memory_space<semaphore_mem>> -> memref<!tpu.dma_semaphore, #tpu.memory_space<semaphore_mem>>
      tpu.enqueue_dma source(%41 : memref<1x128xf32, #tpu.memory_space<any>>) target(%42 : memref<1x128xf32, #tpu.memory_space<vmem>>) target_semaphore(%44 : memref<!tpu.dma_semaphore, #tpu.memory_space<semaphore_mem>>)
      %c7 = arith.constant 7 : index
      %45 = memref.load %arg1[%c7] : memref<8xi32, #tpu.memory_space<smem>>
      %c7_i32 = arith.constant 7 : i32
      %c0_i32_31 = arith.constant 0 : i32
      %46 = tpu.memref_slice %arg3[%45, %c0_i32_31] : memref<128x128xf32, #tpu.memory_space<any>> -> memref<1x128xf32, #tpu.memory_space<any>>
      %c7_i32_32 = arith.constant 7 : i32
      %c0_i32_33 = arith.constant 0 : i32
      %47 = tpu.memref_slice %arg16[%c7_i32_32, %c0_i32_33] : memref<8x128xf32, #tpu.memory_space<vmem>> -> memref<1x128xf32, #tpu.memory_space<vmem>>
      %48 = tpu.memref_slice %arg18[%c7_i32] : memref<8x!tpu.dma_semaphore, #tpu.memory_space<semaphore_mem>> -> memref<1x!tpu.dma_semaphore, #tpu.memory_space<semaphore_mem>>
      %49 = tpu.memref_squeeze %48 : memref<1x!tpu.dma_semaphore, #tpu.memory_space<semaphore_mem>> -> memref<!tpu.dma_semaphore, #tpu.memory_space<semaphore_mem>>
      tpu.enqueue_dma source(%46 : memref<1x128xf32, #tpu.memory_space<any>>) target(%47 : memref<1x128xf32, #tpu.memory_space<vmem>>) target_semaphore(%49 : memref<!tpu.dma_semaphore, #tpu.memory_space<semaphore_mem>>)
      %c0_i32_34 = arith.constant 0 : i32
      %c0_i32_35 = arith.constant 0 : i32
      %50 = tpu.memref_slice %arg3[%10, %c0_i32_35] : memref<128x128xf32, #tpu.memory_space<any>> -> memref<1x128xf32, #tpu.memory_space<any>>
      %c0_i32_36 = arith.constant 0 : i32
      %c0_i32_37 = arith.constant 0 : i32
      %51 = tpu.memref_slice %arg16[%c0_i32_36, %c0_i32_37] : memref<8x128xf32, #tpu.memory_space<vmem>> -> memref<1x128xf32, #tpu.memory_space<vmem>>
      %52 = tpu.memref_slice %arg18[%c0_i32_34] : memref<8x!tpu.dma_semaphore, #tpu.memory_space<semaphore_mem>> -> memref<1x!tpu.dma_semaphore, #tpu.memory_space<semaphore_mem>>
      %53 = tpu.memref_squeeze %52 : memref<1x!tpu.dma_semaphore, #tpu.memory_space<semaphore_mem>> -> memref<!tpu.dma_semaphore, #tpu.memory_space<semaphore_mem>>
      tpu.wait_dma2 semaphore(%53 : memref<!tpu.dma_semaphore, #tpu.memory_space<semaphore_mem>>) src(%50 : memref<1x128xf32, #tpu.memory_space<any>>) dst(%51 : memref<1x128xf32, #tpu.memory_space<vmem>>)
      %c1_i32_38 = arith.constant 1 : i32
      %c0_i32_39 = arith.constant 0 : i32
      %54 = tpu.memref_slice %arg3[%15, %c0_i32_39] : memref<128x128xf32, #tpu.memory_space<any>> -> memref<1x128xf32, #tpu.memory_space<any>>
      %c1_i32_40 = arith.constant 1 : i32
      %c0_i32_41 = arith.constant 0 : i32
      %55 = tpu.memref_slice %arg16[%c1_i32_40, %c0_i32_41] : memref<8x128xf32, #tpu.memory_space<vmem>> -> memref<1x128xf32, #tpu.memory_space<vmem>>
      %56 = tpu.memref_slice %arg18[%c1_i32_38] : memref<8x!tpu.dma_semaphore, #tpu.memory_space<semaphore_mem>> -> memref<1x!tpu.dma_semaphore, #tpu.memory_space<semaphore_mem>>
      %57 = tpu.memref_squeeze %56 : memref<1x!tpu.dma_semaphore, #tpu.memory_space<semaphore_mem>> -> memref<!tpu.dma_semaphore, #tpu.memory_space<semaphore_mem>>
      tpu.wait_dma2 semaphore(%57 : memref<!tpu.dma_semaphore, #tpu.memory_space<semaphore_mem>>) src(%54 : memref<1x128xf32, #tpu.memory_space<any>>) dst(%55 : memref<1x128xf32, #tpu.memory_space<vmem>>)
      %c2_i32_42 = arith.constant 2 : i32
      %c0_i32_43 = arith.constant 0 : i32
      %58 = tpu.memref_slice %arg3[%20, %c0_i32_43] : memref<128x128xf32, #tpu.memory_space<any>> -> memref<1x128xf32, #tpu.memory_space<any>>
      %c2_i32_44 = arith.constant 2 : i32
      %c0_i32_45 = arith.constant 0 : i32
      %59 = tpu.memref_slice %arg16[%c2_i32_44, %c0_i32_45] : memref<8x128xf32, #tpu.memory_space<vmem>> -> memref<1x128xf32, #tpu.memory_space<vmem>>
      %60 = tpu.memref_slice %arg18[%c2_i32_42] : memref<8x!tpu.dma_semaphore, #tpu.memory_space<semaphore_mem>> -> memref<1x!tpu.dma_semaphore, #tpu.memory_space<semaphore_mem>>
      %61 = tpu.memref_squeeze %60 : memref<1x!tpu.dma_semaphore, #tpu.memory_space<semaphore_mem>> -> memref<!tpu.dma_semaphore, #tpu.memory_space<semaphore_mem>>
      tpu.wait_dma2 semaphore(%61 : memref<!tpu.dma_semaphore, #tpu.memory_space<semaphore_mem>>) src(%58 : memref<1x128xf32, #tpu.memory_space<any>>) dst(%59 : memref<1x128xf32, #tpu.memory_space<vmem>>)
      %c3_i32_46 = arith.constant 3 : i32
      %c0_i32_47 = arith.constant 0 : i32
      %62 = tpu.memref_slice %arg3[%25, %c0_i32_47] : memref<128x128xf32, #tpu.memory_space<any>> -> memref<1x128xf32, #tpu.memory_space<any>>
      %c3_i32_48 = arith.constant 3 : i32
      %c0_i32_49 = arith.constant 0 : i32
      %63 = tpu.memref_slice %arg16[%c3_i32_48, %c0_i32_49] : memref<8x128xf32, #tpu.memory_space<vmem>> -> memref<1x128xf32, #tpu.memory_space<vmem>>
      %64 = tpu.memref_slice %arg18[%c3_i32_46] : memref<8x!tpu.dma_semaphore, #tpu.memory_space<semaphore_mem>> -> memref<1x!tpu.dma_semaphore, #tpu.memory_space<semaphore_mem>>
      %65 = tpu.memref_squeeze %64 : memref<1x!tpu.dma_semaphore, #tpu.memory_space<semaphore_mem>> -> memref<!tpu.dma_semaphore, #tpu.memory_space<semaphore_mem>>
      tpu.wait_dma2 semaphore(%65 : memref<!tpu.dma_semaphore, #tpu.memory_space<semaphore_mem>>) src(%62 : memref<1x128xf32, #tpu.memory_space<any>>) dst(%63 : memref<1x128xf32, #tpu.memory_space<vmem>>)
      %c4_i32_50 = arith.constant 4 : i32
      %c0_i32_51 = arith.constant 0 : i32
      %66 = tpu.memref_slice %arg3[%30, %c0_i32_51] : memref<128x128xf32, #tpu.memory_space<any>> -> memref<1x128xf32, #tpu.memory_space<any>>
      %c4_i32_52 = arith.constant 4 : i32
      %c0_i32_53 = arith.constant 0 : i32
      %67 = tpu.memref_slice %arg16[%c4_i32_52, %c0_i32_53] : memref<8x128xf32, #tpu.memory_space<vmem>> -> memref<1x128xf32, #tpu.memory_space<vmem>>
      %68 = tpu.memref_slice %arg18[%c4_i32_50] : memref<8x!tpu.dma_semaphore, #tpu.memory_space<semaphore_mem>> -> memref<1x!tpu.dma_semaphore, #tpu.memory_space<semaphore_mem>>
      %69 = tpu.memref_squeeze %68 : memref<1x!tpu.dma_semaphore, #tpu.memory_space<semaphore_mem>> -> memref<!tpu.dma_semaphore, #tpu.memory_space<semaphore_mem>>
      tpu.wait_dma2 semaphore(%69 : memref<!tpu.dma_semaphore, #tpu.memory_space<semaphore_mem>>) src(%66 : memref<1x128xf32, #tpu.memory_space<any>>) dst(%67 : memref<1x128xf32, #tpu.memory_space<vmem>>)
      %c5_i32_54 = arith.constant 5 : i32
      %c0_i32_55 = arith.constant 0 : i32
      %70 = tpu.memref_slice %arg3[%35, %c0_i32_55] : memref<128x128xf32, #tpu.memory_space<any>> -> memref<1x128xf32, #tpu.memory_space<any>>
      %c5_i32_56 = arith.constant 5 : i32
      %c0_i32_57 = arith.constant 0 : i32
      %71 = tpu.memref_slice %arg16[%c5_i32_56, %c0_i32_57] : memref<8x128xf32, #tpu.memory_space<vmem>> -> memref<1x128xf32, #tpu.memory_space<vmem>>
      %72 = tpu.memref_slice %arg18[%c5_i32_54] : memref<8x!tpu.dma_semaphore, #tpu.memory_space<semaphore_mem>> -> memref<1x!tpu.dma_semaphore, #tpu.memory_space<semaphore_mem>>
      %73 = tpu.memref_squeeze %72 : memref<1x!tpu.dma_semaphore, #tpu.memory_space<semaphore_mem>> -> memref<!tpu.dma_semaphore, #tpu.memory_space<semaphore_mem>>
      tpu.wait_dma2 semaphore(%73 : memref<!tpu.dma_semaphore, #tpu.memory_space<semaphore_mem>>) src(%70 : memref<1x128xf32, #tpu.memory_space<any>>) dst(%71 : memref<1x128xf32, #tpu.memory_space<vmem>>)
      %c6_i32_58 = arith.constant 6 : i32
      %c0_i32_59 = arith.constant 0 : i32
      %74 = tpu.memref_slice %arg3[%40, %c0_i32_59] : memref<128x128xf32, #tpu.memory_space<any>> -> memref<1x128xf32, #tpu.memory_space<any>>
      %c6_i32_60 = arith.constant 6 : i32
      %c0_i32_61 = arith.constant 0 : i32
      %75 = tpu.memref_slice %arg16[%c6_i32_60, %c0_i32_61] : memref<8x128xf32, #tpu.memory_space<vmem>> -> memref<1x128xf32, #tpu.memory_space<vmem>>
      %76 = tpu.memref_slice %arg18[%c6_i32_58] : memref<8x!tpu.dma_semaphore, #tpu.memory_space<semaphore_mem>> -> memref<1x!tpu.dma_semaphore, #tpu.memory_space<semaphore_mem>>
      %77 = tpu.memref_squeeze %76 : memref<1x!tpu.dma_semaphore, #tpu.memory_space<semaphore_mem>> -> memref<!tpu.dma_semaphore, #tpu.memory_space<semaphore_mem>>
      tpu.wait_dma2 semaphore(%77 : memref<!tpu.dma_semaphore, #tpu.memory_space<semaphore_mem>>) src(%74 : memref<1x128xf32, #tpu.memory_space<any>>) dst(%75 : memref<1x128xf32, #tpu.memory_space<vmem>>)
      %c7_i32_62 = arith.constant 7 : i32
      %c0_i32_63 = arith.constant 0 : i32
      %78 = tpu.memref_slice %arg3[%45, %c0_i32_63] : memref<128x128xf32, #tpu.memory_space<any>> -> memref<1x128xf32, #tpu.memory_space<any>>
      %c7_i32_64 = arith.constant 7 : i32
      %c0_i32_65 = arith.constant 0 : i32
      %79 = tpu.memref_slice %arg16[%c7_i32_64, %c0_i32_65] : memref<8x128xf32, #tpu.memory_space<vmem>> -> memref<1x128xf32, #tpu.memory_space<vmem>>
      %80 = tpu.memref_slice %arg18[%c7_i32_62] : memref<8x!tpu.dma_semaphore, #tpu.memory_space<semaphore_mem>> -> memref<1x!tpu.dma_semaphore, #tpu.memory_space<semaphore_mem>>
      %81 = tpu.memref_squeeze %80 : memref<1x!tpu.dma_semaphore, #tpu.memory_space<semaphore_mem>> -> memref<!tpu.dma_semaphore, #tpu.memory_space<semaphore_mem>>
      tpu.wait_dma2 semaphore(%81 : memref<!tpu.dma_semaphore, #tpu.memory_space<semaphore_mem>>) src(%78 : memref<1x128xf32, #tpu.memory_space<any>>) dst(%79 : memref<1x128xf32, #tpu.memory_space<vmem>>)
      %c0_66 = arith.constant 0 : index
      %c0_67 = arith.constant 0 : index
      %82 = vector.load %arg16[%c0_66, %c0_67] : memref<8x128xf32, #tpu.memory_space<vmem>>, vector<8x128xf32>
      %83 = arith.truncf %82 : vector<8x128xf32> to vector<8x128xbf16>
      %c0_68 = arith.constant 0 : index
      %c0_69 = arith.constant 0 : index
      %84 = vector.load %arg4[%c0_68, %c0_69] : memref<128x384xbf16, #tpu.memory_space<vmem>>, vector<128x384xbf16>
      %c0_70 = arith.constant 0 : index
      %c0_71 = arith.constant 0 : index
      %85 = vector.load %arg5[%c0_70, %c0_71] : memref<128x384xbf16, #tpu.memory_space<vmem>>, vector<128x384xbf16>
      %c0_72 = arith.constant 0 : index
      %c0_73 = arith.constant 0 : index
      %86 = vector.load %arg6[%c0_72, %c0_73] : memref<1x384xf32, #tpu.memory_space<vmem>>, vector<1x384xf32>
      %c0_74 = arith.constant 0 : index
      %c0_75 = arith.constant 0 : index
      %87 = vector.load %arg7[%c0_74, %c0_75] : memref<1x384xf32, #tpu.memory_space<vmem>>, vector<1x384xf32>
      %c0_76 = arith.constant 0 : index
      %c0_77 = arith.constant 0 : index
      %c0_78 = arith.constant 0 : index
      %88 = vector.load %arg2[%c0_76, %c0_77, %c0_78] : memref<2x8x128xf32, #tpu.memory_space<vmem>>, vector<1x8x128xf32>
      %89 = vector.shape_cast %88 : vector<1x8x128xf32> to vector<8x128xf32>
      %cst_79 = arith.constant dense<0.000000e+00> : vector<8x384xf32>
      %90 = tpu.matmul %83, %84, %cst_79 {dimension_numbers = #tpu.dot_dimension_numbers<[1], [0], [0], [1], [0, 0, 1, 1], [], []>} : vector<8x128xbf16>, vector<128x384xbf16>, vector<8x384xf32> -> vector<8x384xf32>
      %91 = vector.broadcast %86 : vector<1x384xf32> to vector<8x384xf32>
      %92 = arith.addf %90, %91 : vector<8x384xf32>
      %93 = arith.truncf %89 : vector<8x128xf32> to vector<8x128xbf16>
      %cst_80 = arith.constant dense<0.000000e+00> : vector<8x384xf32>
      %94 = tpu.matmul %93, %85, %cst_80 {dimension_numbers = #tpu.dot_dimension_numbers<[1], [0], [0], [1], [0, 0, 1, 1], [], []>} : vector<8x128xbf16>, vector<128x384xbf16>, vector<8x384xf32> -> vector<8x384xf32>
      %95 = vector.broadcast %87 : vector<1x384xf32> to vector<8x384xf32>
      %96 = arith.addf %94, %95 : vector<8x384xf32>
      %97 = vector.extract_strided_slice %92 {offsets = [0, 0], sizes = [8, 128], strides = [1, 1]} : vector<8x384xf32> to vector<8x128xf32>
      %98 = vector.extract_strided_slice %96 {offsets = [0, 0], sizes = [8, 128], strides = [1, 1]} : vector<8x384xf32> to vector<8x128xf32>
      %99 = arith.addf %97, %98 : vector<8x128xf32>
      %100 = arith.negf %99 : vector<8x128xf32>
      %101 = math.exp %100 : vector<8x128xf32>
      %cst_81 = arith.constant 1.000000e+00 : f32
      %102 = vector.broadcast %cst_81 : f32 to vector<8x128xf32>
      %103 = arith.addf %102, %101 : vector<8x128xf32>
      %104 = arith.divf %102, %103 : vector<8x128xf32>
      %105 = vector.extract_strided_slice %92 {offsets = [0, 128], sizes = [8, 128], strides = [1, 1]} : vector<8x384xf32> to vector<8x128xf32>
      %106 = vector.extract_strided_slice %96 {offsets = [0, 128], sizes = [8, 128], strides = [1, 1]} : vector<8x384xf32> to vector<8x128xf32>
      %107 = arith.addf %105, %106 : vector<8x128xf32>
      %108 = arith.negf %107 : vector<8x128xf32>
      %109 = math.exp %108 : vector<8x128xf32>
      %cst_82 = arith.constant 1.000000e+00 : f32
      %110 = vector.broadcast %cst_82 : f32 to vector<8x128xf32>
      %111 = arith.addf %110, %109 : vector<8x128xf32>
      %112 = arith.divf %110, %111 : vector<8x128xf32>
      %113 = vector.extract_strided_slice %92 {offsets = [0, 256], sizes = [8, 128], strides = [1, 1]} : vector<8x384xf32> to vector<8x128xf32>
      %114 = vector.extract_strided_slice %96 {offsets = [0, 256], sizes = [8, 128], strides = [1, 1]} : vector<8x384xf32> to vector<8x128xf32>
      %115 = arith.mulf %104, %114 : vector<8x128xf32>
      %116 = arith.addf %113, %115 : vector<8x128xf32>
      %117 = math.tanh %116 : vector<8x128xf32>
      %cst_83 = arith.constant 1.000000e+00 : f32
      %118 = vector.broadcast %cst_83 : f32 to vector<8x128xf32>
      %119 = arith.subf %118, %112 : vector<8x128xf32>
      %120 = arith.mulf %119, %117 : vector<8x128xf32>
      %121 = arith.mulf %112, %89 : vector<8x128xf32>
      %122 = arith.addf %120, %121 : vector<8x128xf32>
      %c0_84 = arith.constant 0 : index
      %c0_85 = arith.constant 0 : index
      %c0_86 = arith.constant 0 : index
      %123 = vector.load %arg15[%c0_84, %c0_85, %c0_86] : memref<2x8x128xf32, #tpu.memory_space<vmem>>, vector<1x8x128xf32>
      %124 = vector.shape_cast %123 : vector<1x8x128xf32> to vector<8x128xf32>
      %125 = vector.shape_cast %122 : vector<8x128xf32> to vector<1x8x128xf32>
      tpu.vector_store %arg15[%c0_84, %c0_85, %c0_86], %125 {strides = array<i32>} : memref<2x8x128xf32, #tpu.memory_space<vmem>>, vector<1x8x128xf32>,
      %126 = arith.truncf %122 : vector<8x128xf32> to vector<8x128xbf16>
      %c0_87 = arith.constant 0 : index
      %c0_88 = arith.constant 0 : index
      %127 = vector.load %arg8[%c0_87, %c0_88] : memref<128x384xbf16, #tpu.memory_space<vmem>>, vector<128x384xbf16>
      %c0_89 = arith.constant 0 : index
      %c0_90 = arith.constant 0 : index
      %128 = vector.load %arg9[%c0_89, %c0_90] : memref<128x384xbf16, #tpu.memory_space<vmem>>, vector<128x384xbf16>
      %c0_91 = arith.constant 0 : index
      %c0_92 = arith.constant 0 : index
      %129 = vector.load %arg10[%c0_91, %c0_92] : memref<1x384xf32, #tpu.memory_space<vmem>>, vector<1x384xf32>
      %c0_93 = arith.constant 0 : index
      %c0_94 = arith.constant 0 : index
      %130 = vector.load %arg11[%c0_93, %c0_94] : memref<1x384xf32, #tpu.memory_space<vmem>>, vector<1x384xf32>
      %c1_95 = arith.constant 1 : index
      %c0_96 = arith.constant 0 : index
      %c0_97 = arith.constant 0 : index
      %131 = vector.load %arg2[%c1_95, %c0_96, %c0_97] : memref<2x8x128xf32, #tpu.memory_space<vmem>>, vector<1x8x128xf32>
      %132 = vector.shape_cast %131 : vector<1x8x128xf32> to vector<8x128xf32>
      %cst_98 = arith.constant dense<0.000000e+00> : vector<8x384xf32>
      %133 = tpu.matmul %126, %127, %cst_98 {dimension_numbers = #tpu.dot_dimension_numbers<[1], [0], [0], [1], [0, 0, 1, 1], [], []>} : vector<8x128xbf16>, vector<128x384xbf16>, vector<8x384xf32> -> vector<8x384xf32>
      %134 = vector.broadcast %129 : vector<1x384xf32> to vector<8x384xf32>
      %135 = arith.addf %133, %134 : vector<8x384xf32>
      %136 = arith.truncf %132 : vector<8x128xf32> to vector<8x128xbf16>
      %cst_99 = arith.constant dense<0.000000e+00> : vector<8x384xf32>
      %137 = tpu.matmul %136, %128, %cst_99 {dimension_numbers = #tpu.dot_dimension_numbers<[1], [0], [0], [1], [0, 0, 1, 1], [], []>} : vector<8x128xbf16>, vector<128x384xbf16>, vector<8x384xf32> -> vector<8x384xf32>
      %138 = vector.broadcast %130 : vector<1x384xf32> to vector<8x384xf32>
      %139 = arith.addf %137, %138 : vector<8x384xf32>
      %140 = vector.extract_strided_slice %135 {offsets = [0, 0], sizes = [8, 128], strides = [1, 1]} : vector<8x384xf32> to vector<8x128xf32>
      %141 = vector.extract_strided_slice %139 {offsets = [0, 0], sizes = [8, 128], strides = [1, 1]} : vector<8x384xf32> to vector<8x128xf32>
      %142 = arith.addf %140, %141 : vector<8x128xf32>
      %143 = arith.negf %142 : vector<8x128xf32>
      %144 = math.exp %143 : vector<8x128xf32>
      %cst_100 = arith.constant 1.000000e+00 : f32
      %145 = vector.broadcast %cst_100 : f32 to vector<8x128xf32>
      %146 = arith.addf %145, %144 : vector<8x128xf32>
      %147 = arith.divf %145, %146 : vector<8x128xf32>
      %148 = vector.extract_strided_slice %135 {offsets = [0, 128], sizes = [8, 128], strides = [1, 1]} : vector<8x384xf32> to vector<8x128xf32>
      %149 = vector.extract_strided_slice %139 {offsets = [0, 128], sizes = [8, 128], strides = [1, 1]} : vector<8x384xf32> to vector<8x128xf32>
      %150 = arith.addf %148, %149 : vector<8x128xf32>
      %151 = arith.negf %150 : vector<8x128xf32>
      %152 = math.exp %151 : vector<8x128xf32>
      %cst_101 = arith.constant 1.000000e+00 : f32
      %153 = vector.broadcast %cst_101 : f32 to vector<8x128xf32>
      %154 = arith.addf %153, %152 : vector<8x128xf32>
      %155 = arith.divf %153, %154 : vector<8x128xf32>
      %156 = vector.extract_strided_slice %135 {offsets = [0, 256], sizes = [8, 128], strides = [1, 1]} : vector<8x384xf32> to vector<8x128xf32>
      %157 = vector.extract_strided_slice %139 {offsets = [0, 256], sizes = [8, 128], strides = [1, 1]} : vector<8x384xf32> to vector<8x128xf32>
      %158 = arith.mulf %147, %157 : vector<8x128xf32>
      %159 = arith.addf %156, %158 : vector<8x128xf32>
      %160 = math.tanh %159 : vector<8x128xf32>
      %cst_102 = arith.constant 1.000000e+00 : f32
      %161 = vector.broadcast %cst_102 : f32 to vector<8x128xf32>
      %162 = arith.subf %161, %155 : vector<8x128xf32>
      %163 = arith.mulf %162, %160 : vector<8x128xf32>
      %164 = arith.mulf %155, %132 : vector<8x128xf32>
      %165 = arith.addf %163, %164 : vector<8x128xf32>
      %c1_103 = arith.constant 1 : index
      %c0_104 = arith.constant 0 : index
      %c0_105 = arith.constant 0 : index
      %166 = vector.load %arg15[%c1_103, %c0_104, %c0_105] : memref<2x8x128xf32, #tpu.memory_space<vmem>>, vector<1x8x128xf32>
      %167 = vector.shape_cast %166 : vector<1x8x128xf32> to vector<8x128xf32>
      %168 = vector.shape_cast %165 : vector<8x128xf32> to vector<1x8x128xf32>
      tpu.vector_store %arg15[%c1_103, %c0_104, %c0_105], %168 {strides = array<i32>} : memref<2x8x128xf32, #tpu.memory_space<vmem>>, vector<1x8x128xf32>,
      %169 = arith.truncf %165 : vector<8x128xf32> to vector<8x128xbf16>
      %c0_106 = arith.constant 0 : index
      %c0_107 = arith.constant 0 : index
      %170 = vector.load %arg17[%c0_106, %c0_107] : memref<8x128xbf16, #tpu.memory_space<vmem>>, vector<8x128xbf16>
      tpu.vector_store %arg17[%c0_106, %c0_107], %169 {strides = array<i32>} : memref<8x128xbf16, #tpu.memory_space<vmem>>, vector<8x128xbf16>,
    } else {
    }
    %c0 = arith.constant 0 : index
    %c0_1 = arith.constant 0 : index
    %3 = vector.load %arg17[%c0, %c0_1] : memref<8x128xbf16, #tpu.memory_space<vmem>>, vector<8x128xbf16>
    %c0_2 = arith.constant 0 : index
    %c0_3 = arith.constant 0 : index
    %4 = vector.load %arg12[%c0_2, %c0_3] : memref<128x128xbf16, #tpu.memory_space<vmem>>, vector<128x128xbf16>
    %cst = arith.constant dense<0.000000e+00> : vector<8x128xf32>
    %5 = tpu.matmul %3, %4, %cst {dimension_numbers = #tpu.dot_dimension_numbers<[1], [0], [0], [1], [0, 0, 1, 1], [], []>} : vector<8x128xbf16>, vector<128x128xbf16>, vector<8x128xf32> -> vector<8x128xf32>
    %c0_4 = arith.constant 0 : index
    %c0_5 = arith.constant 0 : index
    %6 = vector.load %arg13[%c0_4, %c0_5] : memref<1x128xf32, #tpu.memory_space<vmem>>, vector<1x128xf32>
    %7 = vector.broadcast %6 : vector<1x128xf32> to vector<8x128xf32>
    %8 = arith.addf %5, %7 : vector<8x128xf32>
    %c0_6 = arith.constant 0 : index
    %c0_7 = arith.constant 0 : index
    %9 = vector.load %arg14[%c0_6, %c0_7] : memref<8x128xf32, #tpu.memory_space<vmem>>, vector<8x128xf32>
    tpu.vector_store %arg14[%c0_6, %c0_7], %8 {strides = array<i32>} : memref<8x128xf32, #tpu.memory_space<vmem>>, vector<8x128xf32>,
    return
  }
  func.func @transform_0(%arg0: i32, %arg1: memref<8xi32, #tpu.memory_space<smem>>) -> (i32, i32, i32) {
    %c0_i32 = arith.constant 0 : i32
    %c0_i32_0 = arith.constant 0 : i32
    %c0_i32_1 = arith.constant 0 : i32
    %c0_i32_2 = arith.constant 0 : i32
    return %c0_i32, %c0_i32_0, %c0_i32_1 : i32, i32, i32
  }
  func.func @transform_2(%arg0: i32, %arg1: memref<8xi32, #tpu.memory_space<smem>>) -> (i32, i32) {
    %c0_i32 = arith.constant 0 : i32
    %c0_i32_0 = arith.constant 0 : i32
    %c0_i32_1 = arith.constant 0 : i32
    return %c0_i32, %c0_i32_0 : i32, i32
  }
  func.func @transform_3(%arg0: i32, %arg1: memref<8xi32, #tpu.memory_space<smem>>) -> (i32, i32) {
    %c0_i32 = arith.constant 0 : i32
    %c0_i32_0 = arith.constant 0 : i32
    %c0_i32_1 = arith.constant 0 : i32
    return %c0_i32, %c0_i32_0 : i32, i32
  }
  func.func @transform_4(%arg0: i32, %arg1: memref<8xi32, #tpu.memory_space<smem>>) -> (i32, i32) {
    %c0_i32 = arith.constant 0 : i32
    %c0_i32_0 = arith.constant 0 : i32
    %c0_i32_1 = arith.constant 0 : i32
    return %c0_i32, %c0_i32_0 : i32, i32
  }
  func.func @transform_5(%arg0: i32, %arg1: memref<8xi32, #tpu.memory_space<smem>>) -> (i32, i32) {
    %c0_i32 = arith.constant 0 : i32
    %c0_i32_0 = arith.constant 0 : i32
    %c0_i32_1 = arith.constant 0 : i32
    return %c0_i32, %c0_i32_0 : i32, i32
  }
  func.func @transform_6(%arg0: i32, %arg1: memref<8xi32, #tpu.memory_space<smem>>) -> (i32, i32) {
    %c0_i32 = arith.constant 0 : i32
    %c0_i32_0 = arith.constant 0 : i32
    %c0_i32_1 = arith.constant 0 : i32
    return %c0_i32, %c0_i32_0 : i32, i32
  }
  func.func @transform_7(%arg0: i32, %arg1: memref<8xi32, #tpu.memory_space<smem>>) -> (i32, i32) {
    %c0_i32 = arith.constant 0 : i32
    %c0_i32_0 = arith.constant 0 : i32
    %c0_i32_1 = arith.constant 0 : i32
    return %c0_i32, %c0_i32_0 : i32, i32
  }
  func.func @transform_8(%arg0: i32, %arg1: memref<8xi32, #tpu.memory_space<smem>>) -> (i32, i32) {
    %c0_i32 = arith.constant 0 : i32
    %c0_i32_0 = arith.constant 0 : i32
    %c0_i32_1 = arith.constant 0 : i32
    return %c0_i32, %c0_i32_0 : i32, i32
  }
  func.func @transform_9(%arg0: i32, %arg1: memref<8xi32, #tpu.memory_space<smem>>) -> (i32, i32) {
    %c0_i32 = arith.constant 0 : i32
    %c0_i32_0 = arith.constant 0 : i32
    %c0_i32_1 = arith.constant 0 : i32
    return %c0_i32, %c0_i32_0 : i32, i32
  }
  func.func @transform_10(%arg0: i32, %arg1: memref<8xi32, #tpu.memory_space<smem>>) -> (i32, i32) {
    %c0_i32 = arith.constant 0 : i32
    %c0_i32_0 = arith.constant 0 : i32
    return %c0_i32, %arg0 : i32, i32
  }
  func.func @transform_11(%arg0: i32, %arg1: memref<8xi32, #tpu.memory_space<smem>>) -> (i32, i32) {
    %c0_i32 = arith.constant 0 : i32
    %c0_i32_0 = arith.constant 0 : i32
    return %c0_i32, %arg0 : i32, i32
  }
  func.func @transform_12(%arg0: i32, %arg1: memref<8xi32, #tpu.memory_space<smem>>) -> (i32, i32) {
    %c0_i32 = arith.constant 0 : i32
    %c0_i32_0 = arith.constant 0 : i32
    return %c0_i32, %arg0 : i32, i32
  }
  func.func @transform_13(%arg0: i32, %arg1: memref<8xi32, #tpu.memory_space<smem>>) -> (i32, i32, i32) {
    %c0_i32 = arith.constant 0 : i32
    %c0_i32_0 = arith.constant 0 : i32
    %c0_i32_1 = arith.constant 0 : i32
    %c0_i32_2 = arith.constant 0 : i32
    return %c0_i32, %c0_i32_0, %c0_i32_1 : i32, i32, i32
  }
}

</mosaic_0001>

<llo_original>
// kernel: decoder_forward.1
$region0: #{decoder_forward.1}
  #allocation0 [shape = 'u32[]', space=smem, size = 0x4, offset = 0x4, fixed_abs, tag = 'smem constant byte address 0x4 - core index']
  #allocation1 [shape = 'u32[72,128]{1,0:T(1,128)}', space=vmem, size = 0x9000, scoped, tag = 'internal scratch']
  #allocation2 [shape = 'f32[8,128]{1,0:T(8,128)}', space=vmem, size = 0x1000, scoped, tag = 'scratch operand']
  #allocation3 [shape = 'bf16[8,128]{1,0:T(8,128)(2,1)}', space=vmem, size = 0x800, scoped, tag = 'scratch operand']
  #allocation4 [shape = 's32[8]{0}', space=sflag, size = 0x20, scoped, tag = 'scratch operand']
  #allocation5 [shape = 's32[1]{0}', space=sflag, size = 0x4, scoped, tag = 'scoped memory for decoder_forward.1']
  #allocation6 [shape = 'u8[512]{0}', space=smem, size = 0x200, scoped, tag = 'prefetched SMEM operand 0']
  #allocation15 [shape = 's32[]', space=sflag, size = 0x4, offset = 0, fixed_abs, tag = 'sflag constant byte address 0x0 - dummy sync flag']
  #allocation16 [shape = 's32[]', space=sflag, size = 0x4, offset = 0, fixed_abs, tag = 'sflag constant byte address 0x0 - dummy sync flag']
  #allocation17 [shape = 'u32[]', space=smem, size = 0x4, offset = 0x44, fixed_abs, tag = 'smem constant byte address 0x44 - assertion arg 0']
  #allocation18 [shape = 'u32[]', space=smem, size = 0x4, offset = 0x48, fixed_abs, tag = 'smem constant byte address 0x48 - assertion arg 1']
  #allocation19 [shape = 's32[]', space=sflag, size = 0x4, offset = 0, fixed_abs, tag = 'sflag constant byte address 0x0 - dummy sync flag']
  #allocation20 [shape = 's32[]', space=sflag, size = 0x4, offset = 0, fixed_abs, tag = 'sflag constant byte address 0x0 - dummy sync flag']
  #allocation21 [shape = 's32[]', space=sflag, size = 0x4, offset = 0, fixed_abs, tag = 'sflag constant byte address 0x0 - dummy sync flag']
  #allocation22 [shape = 's32[]', space=sflag, size = 0x4, offset = 0, fixed_abs, tag = 'sflag constant byte address 0x0 - dummy sync flag']
  #allocation23 [shape = 's32[]', space=sflag, size = 0x4, offset = 0, fixed_abs, tag = 'sflag constant byte address 0x0 - dummy sync flag']
  #allocation24 [shape = 's32[]', space=sflag, size = 0x4, offset = 0, fixed_abs, tag = 'sflag constant byte address 0x0 - dummy sync flag']
  #allocation25 [shape = 's32[]', space=sflag, size = 0x4, offset = 0, fixed_abs, tag = 'sflag constant byte address 0x0 - dummy sync flag']
  #allocation26 [shape = 's32[]', space=sflag, size = 0x4, offset = 0, fixed_abs, tag = 'sflag constant byte address 0x0 - dummy sync flag']
  #allocation27 [shape = 's32[]', space=sflag, size = 0x4, offset = 0, fixed_abs, tag = 'sflag constant byte address 0x0 - dummy sync flag']
  #allocation28 [shape = 's32[]', space=sflag, size = 0x4, offset = 0, fixed_abs, tag = 'sflag constant byte address 0x0 - dummy sync flag']
  #allocation29 [shape = 's32[]', space=sflag, size = 0x4, offset = 0, fixed_abs, tag = 'sflag constant byte address 0x0 - dummy sync flag']
  #allocation30 [shape = 's32[]', space=sflag, size = 0x4, offset = 0, fixed_abs, tag = 'sflag constant byte address 0x0 - dummy sync flag']
  #allocation31 [shape = 's32[]', space=sflag, size = 0x4, offset = 0, fixed_abs, tag = 'sflag constant byte address 0x0 - dummy sync flag']
  #allocation32 [shape = 's32[]', space=sflag, size = 0x4, offset = 0, fixed_abs, tag = 'sflag constant byte address 0x0 - dummy sync flag']
  %s0 = inlined_call_operand.vmem [shape: s32[8], index: 0, kind: input, shape index: {}]
  %s1 = inlined_call_operand.vmem [shape: f32[2,8,128], index: 1, kind: input, shape index: {}, may-alias: {1,14}]
  %s2 = inlined_call_operand.hbm [shape: f32[128,128], index: 2, kind: input, shape index: {}]
  %s3 = inlined_call_operand.hbm [shape: bf16[128,384], index: 3, kind: input, shape index: {}]
  %s4 = inlined_call_operand.hbm [shape: bf16[128,384], index: 4, kind: input, shape index: {}]
  %s5 = inlined_call_operand.vmem [shape: f32[1,384], index: 5, kind: input, shape index: {}]
  %s6 = inlined_call_operand.vmem [shape: f32[1,384], index: 6, kind: input, shape index: {}]
  %s7 = inlined_call_operand.hbm [shape: bf16[128,384], index: 7, kind: input, shape index: {}]
  %s8 = inlined_call_operand.hbm [shape: bf16[128,384], index: 8, kind: input, shape index: {}]
  %s9 = inlined_call_operand.vmem [shape: f32[1,384], index: 9, kind: input, shape index: {}]
  %s10 = inlined_call_operand.vmem [shape: f32[1,384], index: 10, kind: input, shape index: {}]
  %s11 = inlined_call_operand.hbm [shape: bf16[128,128], index: 11, kind: input, shape index: {}]
  %s12 = inlined_call_operand.vmem [shape: f32[1,128], index: 12, kind: input, shape index: {}]
  %s13 = inlined_call_operand.vmem [shape: f32[8,128], index: 13, kind: output, shape index: {0}]
  %s14 = inlined_call_operand.vmem [shape: f32[2,8,128], index: 14, kind: output, shape index: {1}, may-alias: {1,14}]
  %15 = xla_tuple %s13, %s14
  %s16 = sld [smem:[#allocation0]]
  $region118: #{decoder_forward.1} parent=0
    _
  %s18 = ssub.s32 1, %s16
  %s19 = scalar_select 0, %s18, %s16
  %s21 = sshll.u32 %s0, 4
  %s22 = int_to_ptr.vmem [resolvable:$true] %s21
  %24 = dma.vmem_to_smem %s22, 16, [#allocation6], [#allocation5]
  %26 = dma.done [#allocation5], 16
  %27 = sfence
  $region1: #{decoder_forward.1} parent=0
    #allocation7 [shape = 'u8[98304]{0}', space=vmem, size = 0x18000, scoped, tag = 'input window, operand 3, single buffered']
    #allocation8 [shape = 's32[1]{0}', space=sflag, size = 0x4, scoped, tag = 'scoped memory for decoder_forward.1']
    #allocation9 [shape = 'u8[98304]{0}', space=vmem, size = 0x18000, scoped, tag = 'input window, operand 4, single buffered']
    #allocation10 [shape = 's32[1]{0}', space=sflag, size = 0x4, scoped, tag = 'scoped memory for decoder_forward.1']
    #allocation11 [shape = 'u8[98304]{0}', space=vmem, size = 0x18000, scoped, tag = 'input window, operand 7, single buffered']
    #allocation12 [shape = 'u8[98304]{0}', space=vmem, size = 0x18000, scoped, tag = 'input window, operand 8, single buffered']
    #allocation13 [shape = 's32[1]{0}', space=sflag, size = 0x4, scoped, tag = 'scoped memory for decoder_forward.1']
    #allocation14 [shape = 'u8[32768]{0}', space=vmem, size = 0x8000, scoped, tag = 'input window, operand 11, single buffered']
    %28 = vsyncpa [#allocation8], 0
    %29 = vsyncpa [#allocation10], 0
    %30 = vsyncpa [#allocation13], 0
    // Predicated region
    $region2: #{decoder_forward.1} parent=1 // pred_check
      _
    $region3: #{decoder_forward.1} parent=1 // pred_check_branch
      %32 = sbr.rel (0) target = $region5
    $region4: #{decoder_forward.1} parent=1 // pred_region
      _
    $region5: #{decoder_forward.1} parent=1 // pred_fallthru
      _
    // Predicated region
    $region6: #{decoder_forward.1} parent=1 // pred_check
      _
    $region7: #{decoder_forward.1} parent=1 // pred_check_branch
      %34 = sbr.rel (0) target = $region9
    $region8: #{decoder_forward.1} parent=1 // pred_region
      %36 = vsyncadd [#allocation8], 0
      %s37 = sshll.u32 %s3, 4
      %s38 = int_to_ptr.hbm [resolvable:$true] %s37
      %s39 = sshll.u32 [#allocation7], 4
      %s40 = int_to_ptr.vmem [resolvable:$true] %s39
      %45 = dma.hbm_to_vmem [thread:$0]  %s38, 3072, %s40, [#allocation8], 192, 192, 12
    $region9: #{decoder_forward.1} parent=1 // pred_fallthru
      _
    // Predicated region
    $region10: #{decoder_forward.1} parent=1 // pred_check
      _
    $region11: #{decoder_forward.1} parent=1 // pred_check_branch
      %47 = sbr.rel (0) target = $region13
    $region12: #{decoder_forward.1} parent=1 // pred_region
      %49 = vsyncadd [#allocation10], 0
      %s50 = sshll.u32 %s4, 4
      %s51 = int_to_ptr.hbm [resolvable:$true] %s50
      %s52 = sshll.u32 [#allocation9], 4
      %s53 = int_to_ptr.vmem [resolvable:$true] %s52
      %58 = dma.hbm_to_vmem [thread:$0]  %s51, 3072, %s53, [#allocation10], 192, 192, 12
    $region13: #{decoder_forward.1} parent=1 // pred_fallthru
      _
    // Predicated region
    $region14: #{decoder_forward.1} parent=1 // pred_check
      _
    $region15: #{decoder_forward.1} parent=1 // pred_check_branch
      %60 = sbr.rel (0) target = $region17
    $region16: #{decoder_forward.1} parent=1 // pred_region
      _
    $region17: #{decoder_forward.1} parent=1 // pred_fallthru
      _
    // Predicated region
    $region18: #{decoder_forward.1} parent=1 // pred_check
      _
    $region19: #{decoder_forward.1} parent=1 // pred_check_branch
      %62 = sbr.rel (0) target = $region21
    $region20: #{decoder_forward.1} parent=1 // pred_region
      _
    $region21: #{decoder_forward.1} parent=1 // pred_fallthru
      _
    // Predicated region
    $region22: #{decoder_forward.1} parent=1 // pred_check
      _
    $region23: #{decoder_forward.1} parent=1 // pred_check_branch
      %64 = sbr.rel (0) target = $region25
    $region24: #{decoder_forward.1} parent=1 // pred_region
      %66 = vsyncadd [#allocation10], 0
      %s67 = sshll.u32 %s7, 4
      %s68 = int_to_ptr.hbm [resolvable:$true] %s67
      %s69 = sshll.u32 [#allocation11], 4
      %s70 = int_to_ptr.vmem [resolvable:$true] %s69
      %75 = dma.hbm_to_vmem [thread:$0]  %s68, 3072, %s70, [#allocation10], 192, 192, 12
    $region25: #{decoder_forward.1} parent=1 // pred_fallthru
      _
    // Predicated region
    $region26: #{decoder_forward.1} parent=1 // pred_check
      _
    $region27: #{decoder_forward.1} parent=1 // pred_check_branch
      %77 = sbr.rel (0) target = $region29
    $region28: #{decoder_forward.1} parent=1 // pred_region
      %79 = vsyncadd [#allocation13], 0
      %s80 = sshll.u32 %s8, 4
      %s81 = int_to_ptr.hbm [resolvable:$true] %s80
      %s82 = sshll.u32 [#allocation12], 4
      %s83 = int_to_ptr.vmem [resolvable:$true] %s82
      %88 = dma.hbm_to_vmem [thread:$0]  %s81, 3072, %s83, [#allocation13], 192, 192, 12
    $region29: #{decoder_forward.1} parent=1 // pred_fallthru
      _
    // Predicated region
    $region30: #{decoder_forward.1} parent=1 // pred_check
      _
    $region31: #{decoder_forward.1} parent=1 // pred_check_branch
      %90 = sbr.rel (0) target = $region33
    $region32: #{decoder_forward.1} parent=1 // pred_region
      _
    $region33: #{decoder_forward.1} parent=1 // pred_fallthru
      _
    // Predicated region
    $region34: #{decoder_forward.1} parent=1 // pred_check
      _
    $region35: #{decoder_forward.1} parent=1 // pred_check_branch
      %92 = sbr.rel (0) target = $region37
    $region36: #{decoder_forward.1} parent=1 // pred_region
      _
    $region37: #{decoder_forward.1} parent=1 // pred_fallthru
      _
    // Predicated region
    $region38: #{decoder_forward.1} parent=1 // pred_check
      _
    $region39: #{decoder_forward.1} parent=1 // pred_check_branch
      %94 = sbr.rel (0) target = $region41
    $region40: #{decoder_forward.1} parent=1 // pred_region
      %96 = vsyncadd [#allocation13], 0
      %s97 = sshll.u32 %s11, 4
      %s98 = int_to_ptr.hbm [resolvable:$true] %s97
      %s99 = sshll.u32 [#allocation14], 4
      %s100 = int_to_ptr.vmem [resolvable:$true] %s99
      %105 = dma.hbm_to_vmem [thread:$0]  %s98, 1024, %s100, [#allocation13], 64, 64, 4
    $region41: #{decoder_forward.1} parent=1 // pred_fallthru
      _
    // Predicated region
    $region42: #{decoder_forward.1} parent=1 // pred_check
      _
    $region43: #{decoder_forward.1} parent=1 // pred_check_branch
      %107 = sbr.rel (0) target = $region45
    $region44: #{decoder_forward.1} parent=1 // pred_region
      _
    $region45: #{decoder_forward.1} parent=1 // pred_fallthru
      _
    // Predicated region
    $region46: #{decoder_forward.1} parent=1 // pred_check
      _
    $region47: #{decoder_forward.1} parent=1 // pred_check_branch
      %109 = sbr.rel (0) target = $region49
    $region48: #{decoder_forward.1} parent=1 // pred_region
      %111 = dma.done [#allocation8], 3072
    $region49: #{decoder_forward.1} parent=1 // pred_fallthru
      _
    // Predicated region
    $region50: #{decoder_forward.1} parent=1 // pred_check
      _
    $region51: #{decoder_forward.1} parent=1 // pred_check_branch
      %113 = sbr.rel (0) target = $region53
    $region52: #{decoder_forward.1} parent=1 // pred_region
      %115 = dma.done [#allocation10], 3072
    $region53: #{decoder_forward.1} parent=1 // pred_fallthru
      _
    // Predicated region
    $region54: #{decoder_forward.1} parent=1 // pred_check
      _
    $region55: #{decoder_forward.1} parent=1 // pred_check_branch
      %117 = sbr.rel (0) target = $region57
    $region56: #{decoder_forward.1} parent=1 // pred_region
      %119 = dma.done [#allocation10], 3072
    $region57: #{decoder_forward.1} parent=1 // pred_fallthru
      _
    // Predicated region
    $region58: #{decoder_forward.1} parent=1 // pred_check
      _
    $region59: #{decoder_forward.1} parent=1 // pred_check_branch
      %121 = sbr.rel (0) target = $region61
    $region60: #{decoder_forward.1} parent=1 // pred_region
      %123 = dma.done [#allocation13], 3072
    $region61: #{decoder_forward.1} parent=1 // pred_fallthru
      _
    // Predicated region
    $region62: #{decoder_forward.1} parent=1 // pred_check
      _
    $region63: #{decoder_forward.1} parent=1 // pred_check_branch
      %125 = sbr.rel (0) target = $region65
    $region64: #{decoder_forward.1} parent=1 // pred_region
      %127 = dma.done [#allocation13], 1024
    $region65: #{decoder_forward.1} parent=1 // pred_fallthru
      _
    %p128 = scmp.eq.s32.totalorder 0, 0
    // Predicated region
    $region66: #{decoder_forward.1} parent=1 // pred_check
      %p129 = pneg %p128
    $region67: #{decoder_forward.1} parent=1 // pred_check_branch
      %131 = sbr.rel (%p129) target = $region69
    $region68: #{decoder_forward.1} parent=1 // pred_region
      %s132 = sld [smem:[#allocation6]]
      %s133 = scalar_lea.hbm %s2, %s132
      // Predicated region
      $region70: #{decoder_forward.1} parent=68 // pred_check
        _
      $region71: #{decoder_forward.1} parent=68 // pred_check_branch
        %135 = sbr.rel target = $region73
      $region72: #{decoder_forward.1} parent=68 // pred_region
        %136 = sst [smem:[#allocation17]] [#allocation16]
        %137 = sst [smem:[#allocation18]] [#allocation15]
      $region73: #{decoder_forward.1} parent=68 // pred_fallthru
        _
      %139 = shalt.err (0)
      %s141 = sshll.u32 %s133, 4
      %s142 = int_to_ptr.hbm [resolvable:$true] %s141
      %s143 = sshll.u32 [#allocation2], 4
      %s144 = int_to_ptr.vmem [resolvable:$true] %s143
      %146 = dma.hbm_to_vmem [thread:$0]  %s142, 16, %s144, [#allocation4]
      %s147 = sld [smem:[#allocation6 + $0x1]]
      %s148 = scalar_lea.hbm %s2, %s147
      %s149 = scalar_lea.vmem [#allocation2], 1
      %s150 = scalar_lea.sflag [#allocation4], 1
      // Predicated region
      $region74: #{decoder_forward.1} parent=68 // pred_check
        _
      $region75: #{decoder_forward.1} parent=68 // pred_check_branch
        %152 = sbr.rel target = $region77
      $region76: #{decoder_forward.1} parent=68 // pred_region
        %153 = sst [smem:[#allocation17]] [#allocation20]
        %154 = sst [smem:[#allocation18]] [#allocation19]
      $region77: #{decoder_forward.1} parent=68 // pred_fallthru
        _
      %156 = shalt.err (0)
      %s158 = sshll.u32 %s148, 4
      %s159 = int_to_ptr.hbm [resolvable:$true] %s158
      %s160 = sshll.u32 %s149, 4
      %s161 = int_to_ptr.vmem [resolvable:$true] %s160
      %163 = dma.hbm_to_vmem [thread:$0]  %s159, 16, %s161, %s150
      %s164 = sld [smem:[#allocation6 + $0x2]]
      %s165 = scalar_lea.hbm %s2, %s164
      %s166 = scalar_lea.vmem [#allocation2], 2
      %s167 = scalar_lea.sflag [#allocation4], 2
      // Predicated region
      $region78: #{decoder_forward.1} parent=68 // pred_check
        _
      $region79: #{decoder_forward.1} parent=68 // pred_check_branch
        %169 = sbr.rel target = $region81
      $region80: #{decoder_forward.1} parent=68 // pred_region
        %170 = sst [smem:[#allocation17]] [#allocation22]
        %171 = sst [smem:[#allocation18]] [#allocation21]
      $region81: #{decoder_forward.1} parent=68 // pred_fallthru
        _
      %173 = shalt.err (0)
      %s175 = sshll.u32 %s165, 4
      %s176 = int_to_ptr.hbm [resolvable:$true] %s175
      %s177 = sshll.u32 %s166, 4
      %s178 = int_to_ptr.vmem [resolvable:$true] %s177
      %180 = dma.hbm_to_vmem [thread:$0]  %s176, 16, %s178, %s167
      %s181 = sld [smem:[#allocation6 + $0x3]]
      %s182 = scalar_lea.hbm %s2, %s181
      %s183 = scalar_lea.vmem [#allocation2], 3
      %s184 = scalar_lea.sflag [#allocation4], 3
      // Predicated region
      $region82: #{decoder_forward.1} parent=68 // pred_check
        _
      $region83: #{decoder_forward.1} parent=68 // pred_check_branch
        %186 = sbr.rel target = $region85
      $region84: #{decoder_forward.1} parent=68 // pred_region
        %187 = sst [smem:[#allocation17]] [#allocation24]
        %188 = sst [smem:[#allocation18]] [#allocation23]
      $region85: #{decoder_forward.1} parent=68 // pred_fallthru
        _
      %190 = shalt.err (0)
      %s192 = sshll.u32 %s182, 4
      %s193 = int_to_ptr.hbm [resolvable:$true] %s192
      %s194 = sshll.u32 %s183, 4
      %s195 = int_to_ptr.vmem [resolvable:$true] %s194
      %197 = dma.hbm_to_vmem [thread:$0]  %s193, 16, %s195, %s184
      %s198 = sld [smem:[#allocation6 + $0x4]]
      %s199 = scalar_lea.hbm %s2, %s198
      %s200 = scalar_lea.vmem [#allocation2], 4
      %s201 = scalar_lea.sflag [#allocation4], 4
      // Predicated region
      $region86: #{decoder_forward.1} parent=68 // pred_check
        _
      $region87: #{decoder_forward.1} parent=68 // pred_check_branch
        %203 = sbr.rel target = $region89
      $region88: #{decoder_forward.1} parent=68 // pred_region
        %204 = sst [smem:[#allocation17]] [#allocation26]
        %205 = sst [smem:[#allocation18]] [#allocation25]
      $region89: #{decoder_forward.1} parent=68 // pred_fallthru
        _
      %207 = shalt.err (0)
      %s209 = sshll.u32 %s199, 4
      %s210 = int_to_ptr.hbm [resolvable:$true] %s209
      %s211 = sshll.u32 %s200, 4
      %s212 = int_to_ptr.vmem [resolvable:$true] %s211
      %214 = dma.hbm_to_vmem [thread:$0]  %s210, 16, %s212, %s201
      %s215 = sld [smem:[#allocation6 + $0x5]]
      %s216 = scalar_lea.hbm %s2, %s215
      %s217 = scalar_lea.vmem [#allocation2], 5
      %s218 = scalar_lea.sflag [#allocation4], 5
      // Predicated region
      $region90: #{decoder_forward.1} parent=68 // pred_check
        _
      $region91: #{decoder_forward.1} parent=68 // pred_check_branch
        %220 = sbr.rel target = $region93
      $region92: #{decoder_forward.1} parent=68 // pred_region
        %221 = sst [smem:[#allocation17]] [#allocation28]
        %222 = sst [smem:[#allocation18]] [#allocation27]
      $region93: #{decoder_forward.1} parent=68 // pred_fallthru
        _
      %224 = shalt.err (0)
      %s226 = sshll.u32 %s216, 4
      %s227 = int_to_ptr.hbm [resolvable:$true] %s226
      %s228 = sshll.u32 %s217, 4
      %s229 = int_to_ptr.vmem [resolvable:$true] %s228
      %231 = dma.hbm_to_vmem [thread:$0]  %s227, 16, %s229, %s218
      %s232 = sld [smem:[#allocation6 + $0x6]]
      %s233 = scalar_lea.hbm %s2, %s232
      %s234 = scalar_lea.vmem [#allocation2], 6
      %s235 = scalar_lea.sflag [#allocation4], 6
      // Predicated region
      $region94: #{decoder_forward.1} parent=68 // pred_check
        _
      $region95: #{decoder_forward.1} parent=68 // pred_check_branch
        %237 = sbr.rel target = $region97
      $region96: #{decoder_forward.1} parent=68 // pred_region
        %238 = sst [smem:[#allocation17]] [#allocation30]
        %239 = sst [smem:[#allocation18]] [#allocation29]
      $region97: #{decoder_forward.1} parent=68 // pred_fallthru
        _
      %241 = shalt.err (0)
      %s243 = sshll.u32 %s233, 4
      %s244 = int_to_ptr.hbm [resolvable:$true] %s243
      %s245 = sshll.u32 %s234, 4
      %s246 = int_to_ptr.vmem [resolvable:$true] %s245
      %248 = dma.hbm_to_vmem [thread:$0]  %s244, 16, %s246, %s235
      %s249 = sld [smem:[#allocation6 + $0x7]]
      %s250 = scalar_lea.hbm %s2, %s249
      %s251 = scalar_lea.vmem [#allocation2], 7
      %s252 = scalar_lea.sflag [#allocation4], 7
      // Predicated region
      $region98: #{decoder_forward.1} parent=68 // pred_check
        _
      $region99: #{decoder_forward.1} parent=68 // pred_check_branch
        %254 = sbr.rel target = $region101
      $region100: #{decoder_forward.1} parent=68 // pred_region
        %255 = sst [smem:[#allocation17]] [#allocation32]
        %256 = sst [smem:[#allocation18]] [#allocation31]
      $region101: #{decoder_forward.1} parent=68 // pred_fallthru
        _
      %258 = shalt.err (0)
      %s260 = sshll.u32 %s250, 4
      %s261 = int_to_ptr.hbm [resolvable:$true] %s260
      %s262 = sshll.u32 %s251, 4
      %s263 = int_to_ptr.vmem [resolvable:$true] %s262
      %265 = dma.hbm_to_vmem [thread:$0]  %s261, 16, %s263, %s252
      %s266 = smul.u32 1, 1
      %s267 = sshll.u32 %s266, 4
      %268 = dma.done [#allocation4], %s267
      %s269 = sshll.u32 %s266, 4
      %270 = dma.done %s150, %s269
      %s271 = sshll.u32 %s266, 4
      %272 = dma.done %s167, %s271
      %s273 = sshll.u32 %s266, 4
      %274 = dma.done %s184, %s273
      %s275 = sshll.u32 %s266, 4
      %276 = dma.done %s201, %s275
      %s277 = sshll.u32 %s266, 4
      %278 = dma.done %s218, %s277
      %s279 = sshll.u32 %s266, 4
      %280 = dma.done %s235, %s279
      %s281 = sshll.u32 %s266, 4
      %282 = dma.done %s252, %s281
      %v283 = vld [vmem:[#allocation2] sm:$0xff]
      %v284 = vpack.c.bf16 %v283, %v283
      %v285 = vld [vmem:[#allocation7] sm:$0xff]
      %v286 = vld [vmem:[#allocation7 + $0x8] sm:$0xf]
      %v287 = vld [vmem:[#allocation7 + $0xc] sm:$0xff]
      %v288 = vld [vmem:[#allocation7 + $0x14] sm:$0xf]
      %v289 = vld [vmem:[#allocation7 + $0x18] sm:$0xff]
      %v290 = vld [vmem:[#allocation7 + $0x20] sm:$0xf]
      %v291 = vld [vmem:[#allocation7 + $0x24] sm:$0xff]
      %v292 = vld [vmem:[#allocation7 + $0x2c] sm:$0xf]
      %v293 = vld [vmem:[#allocation7 + $0x30] sm:$0xff]
      %v294 = vld [vmem:[#allocation7 + $0x38] sm:$0xf]
      %v295 = vld [vmem:[#allocation7 + $0x3c] sm:$0xff]
      %v296 = vld [vmem:[#allocation7 + $0x44] sm:$0xf]
      %v297 = vld [vmem:[#allocation7 + $0x48] sm:$0xff]
      %v298 = vld [vmem:[#allocation7 + $0x50] sm:$0xf]
      %v299 = vld [vmem:[#allocation7 + $0x54] sm:$0xff]
      %v300 = vld [vmem:[#allocation7 + $0x5c] sm:$0xf]
      %v301 = vld [vmem:[#allocation7 + $0x60] sm:$0xff]
      %v302 = vld [vmem:[#allocation7 + $0x68] sm:$0xf]
      %v303 = vld [vmem:[#allocation7 + $0x6c] sm:$0xff]
      %v304 = vld [vmem:[#allocation7 + $0x74] sm:$0xf]
      %v305 = vld [vmem:[#allocation7 + $0x78] sm:$0xff]
      %v306 = vld [vmem:[#allocation7 + $0x80] sm:$0xf]
      %v307 = vld [vmem:[#allocation7 + $0x84] sm:$0xff]
      %v308 = vld [vmem:[#allocation7 + $0x8c] sm:$0xf]
      %v309 = vld [vmem:[#allocation7 + $0x90] sm:$0xff]
      %v310 = vld [vmem:[#allocation7 + $0x98] sm:$0xf]
      %v311 = vld [vmem:[#allocation7 + $0x9c] sm:$0xff]
      %v312 = vld [vmem:[#allocation7 + $0xa4] sm:$0xf]
      %v313 = vld [vmem:[#allocation7 + $0xa8] sm:$0xff]
      %v314 = vld [vmem:[#allocation7 + $0xb0] sm:$0xf]
      %v315 = vld [vmem:[#allocation7 + $0xb4] sm:$0xff]
      %v316 = vld [vmem:[#allocation7 + $0xbc] sm:$0xf]
      %v317 = vld [vmem:[#allocation9] sm:$0xff]
      %v318 = vld [vmem:[#allocation9 + $0x8] sm:$0xf]
      %v319 = vld [vmem:[#allocation9 + $0xc] sm:$0xff]
      %v320 = vld [vmem:[#allocation9 + $0x14] sm:$0xf]
      %v321 = vld [vmem:[#allocation9 + $0x18] sm:$0xff]
      %v322 = vld [vmem:[#allocation9 + $0x20] sm:$0xf]
      %v323 = vld [vmem:[#allocation9 + $0x24] sm:$0xff]
      %v324 = vld [vmem:[#allocation9 + $0x2c] sm:$0xf]
      %v325 = vld [vmem:[#allocation9 + $0x30] sm:$0xff]
      %v326 = vld [vmem:[#allocation9 + $0x38] sm:$0xf]
      %v327 = vld [vmem:[#allocation9 + $0x3c] sm:$0xff]
      %v328 = vld [vmem:[#allocation9 + $0x44] sm:$0xf]
      %v329 = vld [vmem:[#allocation9 + $0x48] sm:$0xff]
      %v330 = vld [vmem:[#allocation9 + $0x50] sm:$0xf]
      %v331 = vld [vmem:[#allocation9 + $0x54] sm:$0xff]
      %v332 = vld [vmem:[#allocation9 + $0x5c] sm:$0xf]
      %v333 = vld [vmem:[#allocation9 + $0x60] sm:$0xff]
      %v334 = vld [vmem:[#allocation9 + $0x68] sm:$0xf]
      %v335 = vld [vmem:[#allocation9 + $0x6c] sm:$0xff]
      %v336 = vld [vmem:[#allocation9 + $0x74] sm:$0xf]
      %v337 = vld [vmem:[#allocation9 + $0x78] sm:$0xff]
      %v338 = vld [vmem:[#allocation9 + $0x80] sm:$0xf]
      %v339 = vld [vmem:[#allocation9 + $0x84] sm:$0xff]
      %v340 = vld [vmem:[#allocation9 + $0x8c] sm:$0xf]
      %v341 = vld [vmem:[#allocation9 + $0x90] sm:$0xff]
      %v342 = vld [vmem:[#allocation9 + $0x98] sm:$0xf]
      %v343 = vld [vmem:[#allocation9 + $0x9c] sm:$0xff]
      %v344 = vld [vmem:[#allocation9 + $0xa4] sm:$0xf]
      %v345 = vld [vmem:[#allocation9 + $0xa8] sm:$0xff]
      %v346 = vld [vmem:[#allocation9 + $0xb0] sm:$0xf]
      %v347 = vld [vmem:[#allocation9 + $0xb4] sm:$0xff]
      %v348 = vld [vmem:[#allocation9 + $0xbc] sm:$0xf]
      %v349 = vld [vmem:[%s5] sm:$0x7]
      %v350 = vld [vmem:[%s6] sm:$0x7]
      %v351 = vld [vmem:[%s1] sm:$0xff]
      %v353 = vperm.slane %v349, 0
      %v354 = vperm.slane %v349, 1
      %v355 = vperm.slane %v349, 2
      %v391 = vunpack.c.l.b16 %v285
      %v392 = vunpack.c.h.b16 %v285
      %v393 = vunpack.c.l.b16 %v286
      %v394 = vunpack.c.l.b16 %v287
      %v395 = vunpack.c.h.b16 %v287
      %v396 = vunpack.c.l.b16 %v288
      %v397 = vunpack.c.l.b16 %v289
      %v398 = vunpack.c.h.b16 %v289
      %v399 = vunpack.c.l.b16 %v290
      %v400 = vunpack.c.l.b16 %v291
      %v401 = vunpack.c.h.b16 %v291
      %v402 = vunpack.c.l.b16 %v292
      %v403 = vunpack.c.l.b16 %v293
      %v404 = vunpack.c.h.b16 %v293
      %v405 = vunpack.c.l.b16 %v294
      %v406 = vunpack.c.l.b16 %v295
      %v407 = vunpack.c.h.b16 %v295
      %v408 = vunpack.c.l.b16 %v296
      %v409 = vunpack.c.l.b16 %v297
      %v410 = vunpack.c.h.b16 %v297
      %v411 = vunpack.c.l.b16 %v298
      %v412 = vunpack.c.l.b16 %v299
      %v413 = vunpack.c.h.b16 %v299
      %v414 = vunpack.c.l.b16 %v300
      %v415 = vunpack.c.l.b16 %v301
      %v416 = vunpack.c.h.b16 %v301
      %v417 = vunpack.c.l.b16 %v302
      %v418 = vunpack.c.l.b16 %v303
      %v419 = vunpack.c.h.b16 %v303
      %v420 = vunpack.c.l.b16 %v304
      %v421 = vunpack.c.l.b16 %v305
      %v422 = vunpack.c.h.b16 %v305
      %v423 = vunpack.c.l.b16 %v306
      %v424 = vunpack.c.l.b16 %v307
      %v425 = vunpack.c.h.b16 %v307
      %v426 = vunpack.c.l.b16 %v308
      %v427 = vunpack.c.l.b16 %v309
      %v428 = vunpack.c.h.b16 %v309
      %v429 = vunpack.c.l.b16 %v310
      %v430 = vunpack.c.l.b16 %v311
      %v431 = vunpack.c.h.b16 %v311
      %v432 = vunpack.c.l.b16 %v312
      %v433 = vunpack.c.l.b16 %v313
      %v434 = vunpack.c.h.b16 %v313
      %v435 = vunpack.c.l.b16 %v314
      %v436 = vunpack.c.l.b16 %v315
      %v437 = vunpack.c.h.b16 %v315
      %v438 = vunpack.c.l.b16 %v316
      %v439 = vpack.c.b16 %v394, %v391
      %v440 = vpack.c.b16 %v395, %v392
      %v441 = vpack.c.b16 %v396, %v393
      %v442 = vpack.c.b16 %v400, %v397
      %v443 = vpack.c.b16 %v401, %v398
      %v444 = vpack.c.b16 %v402, %v399
      %v445 = vpack.c.b16 %v406, %v403
      %v446 = vpack.c.b16 %v407, %v404
      %v447 = vpack.c.b16 %v408, %v405
      %v448 = vpack.c.b16 %v412, %v409
      %v449 = vpack.c.b16 %v413, %v410
      %v450 = vpack.c.b16 %v414, %v411
      %v451 = vpack.c.b16 %v418, %v415
      %v452 = vpack.c.b16 %v419, %v416
      %v453 = vpack.c.b16 %v420, %v417
      %v454 = vpack.c.b16 %v424, %v421
      %v455 = vpack.c.b16 %v425, %v422
      %v456 = vpack.c.b16 %v426, %v423
      %v457 = vpack.c.b16 %v430, %v427
      %v458 = vpack.c.b16 %v431, %v428
      %v459 = vpack.c.b16 %v432, %v429
      %v460 = vpack.c.b16 %v436, %v433
      %v461 = vpack.c.b16 %v437, %v434
      %v462 = vpack.c.b16 %v438, %v435
      %487 = vmatpush.bf16.msra.mxu0 %v460
      %488 = vmatpush.bf16.msra.mxu0 %v457
      %489 = vmatpush.bf16.msra.mxu0 %v454
      %490 = vmatpush.bf16.msra.mxu0 %v451
      %491 = vmatpush.bf16.msra.mxu0 %v448
      %492 = vmatpush.bf16.msra.mxu0 %v445
      %493 = vmatpush.bf16.msra.mxu0 %v442
      %494 = vmatpush.bf16.msra.mxu0 %v439
      %495 = vmatmul.bf16.gmra.mxu0 %v284
      %v496 = vpop.f32.mrf.mxu0
      %v497 = vadd.f32 %v353, %v496
      %v498 = vpop.f32.mrf.mxu0
      %499 = vdwg.mxu0
      %500 = vmatpush.bf16.msra.mxu0 %v461
      %501 = vmatpush.bf16.msra.mxu0 %v458
      %502 = vmatpush.bf16.msra.mxu0 %v455
      %503 = vmatpush.bf16.msra.mxu0 %v452
      %504 = vmatpush.bf16.msra.mxu0 %v449
      %505 = vmatpush.bf16.msra.mxu0 %v446
      %506 = vmatpush.bf16.msra.mxu0 %v443
      %507 = vmatpush.bf16.msra.mxu0 %v440
      %508 = vmatmul.bf16.gmra.mxu0 %v284
      %v509 = vpop.f32.mrf.mxu0
      %v510 = vadd.f32 %v354, %v509
      %v511 = vpop.f32.mrf.mxu0
      %512 = vdwg.mxu0
      %513 = vmatpush.bf16.msra.mxu0 %v462
      %514 = vmatpush.bf16.msra.mxu0 %v459
      %515 = vmatpush.bf16.msra.mxu0 %v456
      %516 = vmatpush.bf16.msra.mxu0 %v453
      %517 = vmatpush.bf16.msra.mxu0 %v450
      %518 = vmatpush.bf16.msra.mxu0 %v447
      %519 = vmatpush.bf16.msra.mxu0 %v444
      %520 = vmatpush.bf16.msra.mxu0 %v441
      %521 = vmatmul.bf16.gmra.mxu0 %v284
      %v522 = vpop.f32.mrf.mxu0
      %v523 = vadd.f32 %v355, %v522
      %v524 = vpop.f32.mrf.mxu0
      %525 = vdwg.mxu0
      %v526 = vpack.c.bf16 %v351, %v351
      %v528 = vperm.slane %v350, 0
      %v529 = vperm.slane %v350, 1
      %v530 = vperm.slane %v350, 2
      %v566 = vunpack.c.l.b16 %v317
      %v567 = vunpack.c.h.b16 %v317
      %v568 = vunpack.c.l.b16 %v318
      %v569 = vunpack.c.l.b16 %v319
      %v570 = vunpack.c.h.b16 %v319
      %v571 = vunpack.c.l.b16 %v320
      %v572 = vunpack.c.l.b16 %v321
      %v573 = vunpack.c.h.b16 %v321
      %v574 = vunpack.c.l.b16 %v322
      %v575 = vunpack.c.l.b16 %v323
      %v576 = vunpack.c.h.b16 %v323
      %v577 = vunpack.c.l.b16 %v324
      %v578 = vunpack.c.l.b16 %v325
      %v579 = vunpack.c.h.b16 %v325
      %v580 = vunpack.c.l.b16 %v326
      %v581 = vunpack.c.l.b16 %v327
      %v582 = vunpack.c.h.b16 %v327
      %v583 = vunpack.c.l.b16 %v328
      %v584 = vunpack.c.l.b16 %v329
      %v585 = vunpack.c.h.b16 %v329
      %v586 = vunpack.c.l.b16 %v330
      %v587 = vunpack.c.l.b16 %v331
      %v588 = vunpack.c.h.b16 %v331
      %v589 = vunpack.c.l.b16 %v332
      %v590 = vunpack.c.l.b16 %v333
      %v591 = vunpack.c.h.b16 %v333
      %v592 = vunpack.c.l.b16 %v334
      %v593 = vunpack.c.l.b16 %v335
      %v594 = vunpack.c.h.b16 %v335
      %v595 = vunpack.c.l.b16 %v336
      %v596 = vunpack.c.l.b16 %v337
      %v597 = vunpack.c.h.b16 %v337
      %v598 = vunpack.c.l.b16 %v338
      %v599 = vunpack.c.l.b16 %v339
      %v600 = vunpack.c.h.b16 %v339
      %v601 = vunpack.c.l.b16 %v340
      %v602 = vunpack.c.l.b16 %v341
      %v603 = vunpack.c.h.b16 %v341
      %v604 = vunpack.c.l.b16 %v342
      %v605 = vunpack.c.l.b16 %v343
      %v606 = vunpack.c.h.b16 %v343
      %v607 = vunpack.c.l.b16 %v344
      %v608 = vunpack.c.l.b16 %v345
      %v609 = vunpack.c.h.b16 %v345
      %v610 = vunpack.c.l.b16 %v346
      %v611 = vunpack.c.l.b16 %v347
      %v612 = vunpack.c.h.b16 %v347
      %v613 = vunpack.c.l.b16 %v348
      %v614 = vpack.c.b16 %v569, %v566
      %v615 = vpack.c.b16 %v570, %v567
      %v616 = vpack.c.b16 %v571, %v568
      %v617 = vpack.c.b16 %v575, %v572
      %v618 = vpack.c.b16 %v576, %v573
      %v619 = vpack.c.b16 %v577, %v574
      %v620 = vpack.c.b16 %v581, %v578
      %v621 = vpack.c.b16 %v582, %v579
      %v622 = vpack.c.b16 %v583, %v580
      %v623 = vpack.c.b16 %v587, %v584
      %v624 = vpack.c.b16 %v588, %v585
      %v625 = vpack.c.b16 %v589, %v586
      %v626 = vpack.c.b16 %v593, %v590
      %v627 = vpack.c.b16 %v594, %v591
      %v628 = vpack.c.b16 %v595, %v592
      %v629 = vpack.c.b16 %v599, %v596
      %v630 = vpack.c.b16 %v600, %v597
      %v631 = vpack.c.b16 %v601, %v598
      %v632 = vpack.c.b16 %v605, %v602
      %v633 = vpack.c.b16 %v606, %v603
      %v634 = vpack.c.b16 %v607, %v604
      %v635 = vpack.c.b16 %v611, %v608
      %v636 = vpack.c.b16 %v612, %v609
      %v637 = vpack.c.b16 %v613, %v610
      %662 = vmatpush.bf16.msra.mxu0 %v635
      %663 = vmatpush.bf16.msra.mxu0 %v632
      %664 = vmatpush.bf16.msra.mxu0 %v629
      %665 = vmatpush.bf16.msra.mxu0 %v626
      %666 = vmatpush.bf16.msra.mxu0 %v623
      %667 = vmatpush.bf16.msra.mxu0 %v620
      %668 = vmatpush.bf16.msra.mxu0 %v617
      %669 = vmatpush.bf16.msra.mxu0 %v614
      %670 = vmatmul.bf16.gmra.mxu0 %v526
      %v671 = vpop.f32.mrf.mxu0
      %v672 = vadd.f32 %v528, %v671
      %v673 = vpop.f32.mrf.mxu0
      %674 = vdwg.mxu0
      %675 = vmatpush.bf16.msra.mxu0 %v636
      %676 = vmatpush.bf16.msra.mxu0 %v633
      %677 = vmatpush.bf16.msra.mxu0 %v630
      %678 = vmatpush.bf16.msra.mxu0 %v627
      %679 = vmatpush.bf16.msra.mxu0 %v624
      %680 = vmatpush.bf16.msra.mxu0 %v621
      %681 = vmatpush.bf16.msra.mxu0 %v618
      %682 = vmatpush.bf16.msra.mxu0 %v615
      %683 = vmatmul.bf16.gmra.mxu0 %v526
      %v684 = vpop.f32.mrf.mxu0
      %v685 = vadd.f32 %v529, %v684
      %v686 = vpop.f32.mrf.mxu0
      %687 = vdwg.mxu0
      %688 = vmatpush.bf16.msra.mxu0 %v637
      %689 = vmatpush.bf16.msra.mxu0 %v634
      %690 = vmatpush.bf16.msra.mxu0 %v631
      %691 = vmatpush.bf16.msra.mxu0 %v628
      %692 = vmatpush.bf16.msra.mxu0 %v625
      %693 = vmatpush.bf16.msra.mxu0 %v622
      %694 = vmatpush.bf16.msra.mxu0 %v619
      %695 = vmatpush.bf16.msra.mxu0 %v616
      %696 = vmatmul.bf16.gmra.mxu0 %v526
      %v697 = vpop.f32.mrf.mxu0
      %v698 = vadd.f32 %v530, %v697
      %v699 = vpop.f32.mrf.mxu0
      %700 = vdwg.mxu0
      %v701 = vadd.f32 %v497, %v672
      %v702 = vxor.u32 %v701, 2147483648
      %v703 = vmul.f32 %v702, 1.442695
      %v704 = vpow.pop %v703
      %v705 = vadd.f32 %v704, 1.0
      %v706 = vrcp.pop %v705
      %v707 = vmul.f32 %v705, %v706
      %v708 = vsub.f32 1.0, %v707
      %v709 = vmul.f32 %v706, %v708
      %v710 = vadd.f32 %v706, %v709
      %vm711 = vweird.f32 %v705
      %vm712 = vweird.f32 %v706
      %vm713 = vmor %vm711, %vm712
      %v714 = vsel %vm713, %v706, %v710
      %v715 = vand.u32 2147483647, %v705
      %vm716 = vcmp.eq.f32.partialorder %v715, 8.507059e+37
      %v717 = vand.u32 %v705, 2147483648
      %v718 = vor.u32 1.1754944e-38, %v717
      %v719 = vsel %vm716, %v718, %v714
      %v720 = vmul.f32 1.0, %v719
      %v721 = vadd.f32 %v510, %v685
      %v722 = vxor.u32 %v721, 2147483648
      %v723 = vmul.f32 %v722, 1.442695
      %v724 = vpow.pop %v723
      %v725 = vadd.f32 %v724, 1.0
      %v726 = vrcp.pop %v725
      %v727 = vmul.f32 %v725, %v726
      %v728 = vsub.f32 1.0, %v727
      %v729 = vmul.f32 %v726, %v728
      %v730 = vadd.f32 %v726, %v729
      %vm731 = vweird.f32 %v725
      %vm732 = vweird.f32 %v726
      %vm733 = vmor %vm731, %vm732
      %v734 = vsel %vm733, %v726, %v730
      %v735 = vand.u32 2147483647, %v725
      %vm736 = vcmp.eq.f32.partialorder %v735, 8.507059e+37
      %v737 = vand.u32 %v725, 2147483648
      %v738 = vor.u32 1.1754944e-38, %v737
      %v739 = vsel %vm736, %v738, %v734
      %v740 = vmul.f32 1.0, %v739
      %v741 = vmul.f32 %v720, %v698
      %v742 = vadd.f32 %v523, %v741
      %v743 = vtanh.pop %v742
      %v744 = vsub.f32 1.0, %v740
      %v745 = vmul.f32 %v744, %v743
      %v746 = vmul.f32 %v740, %v351
      %v747 = vadd.f32 %v745, %v746
      %748 = vst [vmem:[%s14] sm:$0xff] %v747
      %v749 = vpack.c.bf16 %v747, %v747
      %v750 = vld [vmem:[#allocation11] sm:$0xff]
      %v751 = vld [vmem:[#allocation11 + $0x8] sm:$0xf]
      %v752 = vld [vmem:[#allocation11 + $0xc] sm:$0xff]
      %v753 = vld [vmem:[#allocation11 + $0x14] sm:$0xf]
      %v754 = vld [vmem:[#allocation11 + $0x18] sm:$0xff]
      %v755 = vld [vmem:[#allocation11 + $0x20] sm:$0xf]
      %v756 = vld [vmem:[#allocation11 + $0x24] sm:$0xff]
      %v757 = vld [vmem:[#allocation11 + $0x2c] sm:$0xf]
      %v758 = vld [vmem:[#allocation11 + $0x30] sm:$0xff]
      %v759 = vld [vmem:[#allocation11 + $0x38] sm:$0xf]
      %v760 = vld [vmem:[#allocation11 + $0x3c] sm:$0xff]
      %v761 = vld [vmem:[#allocation11 + $0x44] sm:$0xf]
      %v762 = vld [vmem:[#allocation11 + $0x48] sm:$0xff]
      %v763 = vld [vmem:[#allocation11 + $0x50] sm:$0xf]
      %v764 = vld [vmem:[#allocation11 + $0x54] sm:$0xff]
      %v765 = vld [vmem:[#allocation11 + $0x5c] sm:$0xf]
      %v766 = vld [vmem:[#allocation11 + $0x60] sm:$0xff]
      %v767 = vld [vmem:[#allocation11 + $0x68] sm:$0xf]
      %v768 = vld [vmem:[#allocation11 + $0x6c] sm:$0xff]
      %v769 = vld [vmem:[#allocation11 + $0x74] sm:$0xf]
      %v770 = vld [vmem:[#allocation11 + $0x78] sm:$0xff]
      %v771 = vld [vmem:[#allocation11 + $0x80] sm:$0xf]
      %v772 = vld [vmem:[#allocation11 + $0x84] sm:$0xff]
      %v773 = vld [vmem:[#allocation11 + $0x8c] sm:$0xf]
      %v774 = vld [vmem:[#allocation11 + $0x90] sm:$0xff]
      %v775 = vld [vmem:[#allocation11 + $0x98] sm:$0xf]
      %v776 = vld [vmem:[#allocation11 + $0x9c] sm:$0xff]
      %v777 = vld [vmem:[#allocation11 + $0xa4] sm:$0xf]
      %v778 = vld [vmem:[#allocation11 + $0xa8] sm:$0xff]
      %v779 = vld [vmem:[#allocation11 + $0xb0] sm:$0xf]
      %v780 = vld [vmem:[#allocation11 + $0xb4] sm:$0xff]
      %v781 = vld [vmem:[#allocation11 + $0xbc] sm:$0xf]
      %v782 = vld [vmem:[#allocation12] sm:$0xff]
      %v783 = vld [vmem:[#allocation12 + $0x8] sm:$0xf]
      %v784 = vld [vmem:[#allocation12 + $0xc] sm:$0xff]
      %v785 = vld [vmem:[#allocation12 + $0x14] sm:$0xf]
      %v786 = vld [vmem:[#allocation12 + $0x18] sm:$0xff]
      %v787 = vld [vmem:[#allocation12 + $0x20] sm:$0xf]
      %v788 = vld [vmem:[#allocation12 + $0x24] sm:$0xff]
      %v789 = vld [vmem:[#allocation12 + $0x2c] sm:$0xf]
      %v790 = vld [vmem:[#allocation12 + $0x30] sm:$0xff]
      %v791 = vld [vmem:[#allocation12 + $0x38] sm:$0xf]
      %v792 = vld [vmem:[#allocation12 + $0x3c] sm:$0xff]
      %v793 = vld [vmem:[#allocation12 + $0x44] sm:$0xf]
      %v794 = vld [vmem:[#allocation12 + $0x48] sm:$0xff]
      %v795 = vld [vmem:[#allocation12 + $0x50] sm:$0xf]
      %v796 = vld [vmem:[#allocation12 + $0x54] sm:$0xff]
      %v797 = vld [vmem:[#allocation12 + $0x5c] sm:$0xf]
      %v798 = vld [vmem:[#allocation12 + $0x60] sm:$0xff]
      %v799 = vld [vmem:[#allocation12 + $0x68] sm:$0xf]
      %v800 = vld [vmem:[#allocation12 + $0x6c] sm:$0xff]
      %v801 = vld [vmem:[#allocation12 + $0x74] sm:$0xf]
      %v802 = vld [vmem:[#allocation12 + $0x78] sm:$0xff]
      %v803 = vld [vmem:[#allocation12 + $0x80] sm:$0xf]
      %v804 = vld [vmem:[#allocation12 + $0x84] sm:$0xff]
      %v805 = vld [vmem:[#allocation12 + $0x8c] sm:$0xf]
      %v806 = vld [vmem:[#allocation12 + $0x90] sm:$0xff]
      %v807 = vld [vmem:[#allocation12 + $0x98] sm:$0xf]
      %v808 = vld [vmem:[#allocation12 + $0x9c] sm:$0xff]
      %v809 = vld [vmem:[#allocation12 + $0xa4] sm:$0xf]
      %v810 = vld [vmem:[#allocation12 + $0xa8] sm:$0xff]
      %v811 = vld [vmem:[#allocation12 + $0xb0] sm:$0xf]
      %v812 = vld [vmem:[#allocation12 + $0xb4] sm:$0xff]
      %v813 = vld [vmem:[#allocation12 + $0xbc] sm:$0xf]
      %v814 = vld [vmem:[%s9] sm:$0x7]
      %v815 = vld [vmem:[%s10] sm:$0x7]
      %s816 = scalar_lea.vmem %s1, 8
      %v817 = vld [vmem:[%s816] sm:$0xff]
      %v819 = vperm.slane %v814, 0
      %v820 = vperm.slane %v814, 1
      %v821 = vperm.slane %v814, 2
      %v857 = vunpack.c.l.b16 %v750
      %v858 = vunpack.c.h.b16 %v750
      %v859 = vunpack.c.l.b16 %v751
      %v860 = vunpack.c.l.b16 %v752
      %v861 = vunpack.c.h.b16 %v752
      %v862 = vunpack.c.l.b16 %v753
      %v863 = vunpack.c.l.b16 %v754
      %v864 = vunpack.c.h.b16 %v754
      %v865 = vunpack.c.l.b16 %v755
      %v866 = vunpack.c.l.b16 %v756
      %v867 = vunpack.c.h.b16 %v756
      %v868 = vunpack.c.l.b16 %v757
      %v869 = vunpack.c.l.b16 %v758
      %v870 = vunpack.c.h.b16 %v758
      %v871 = vunpack.c.l.b16 %v759
      %v872 = vunpack.c.l.b16 %v760
      %v873 = vunpack.c.h.b16 %v760
      %v874 = vunpack.c.l.b16 %v761
      %v875 = vunpack.c.l.b16 %v762
      %v876 = vunpack.c.h.b16 %v762
      %v877 = vunpack.c.l.b16 %v763
      %v878 = vunpack.c.l.b16 %v764
      %v879 = vunpack.c.h.b16 %v764
      %v880 = vunpack.c.l.b16 %v765
      %v881 = vunpack.c.l.b16 %v766
      %v882 = vunpack.c.h.b16 %v766
      %v883 = vunpack.c.l.b16 %v767
      %v884 = vunpack.c.l.b16 %v768
      %v885 = vunpack.c.h.b16 %v768
      %v886 = vunpack.c.l.b16 %v769
      %v887 = vunpack.c.l.b16 %v770
      %v888 = vunpack.c.h.b16 %v770
      %v889 = vunpack.c.l.b16 %v771
      %v890 = vunpack.c.l.b16 %v772
      %v891 = vunpack.c.h.b16 %v772
      %v892 = vunpack.c.l.b16 %v773
      %v893 = vunpack.c.l.b16 %v774
      %v894 = vunpack.c.h.b16 %v774
      %v895 = vunpack.c.l.b16 %v775
      %v896 = vunpack.c.l.b16 %v776
      %v897 = vunpack.c.h.b16 %v776
      %v898 = vunpack.c.l.b16 %v777
      %v899 = vunpack.c.l.b16 %v778
      %v900 = vunpack.c.h.b16 %v778
      %v901 = vunpack.c.l.b16 %v779
      %v902 = vunpack.c.l.b16 %v780
      %v903 = vunpack.c.h.b16 %v780
      %v904 = vunpack.c.l.b16 %v781
      %v905 = vpack.c.b16 %v860, %v857
      %v906 = vpack.c.b16 %v861, %v858
      %v907 = vpack.c.b16 %v862, %v859
      %v908 = vpack.c.b16 %v866, %v863
      %v909 = vpack.c.b16 %v867, %v864
      %v910 = vpack.c.b16 %v868, %v865
      %v911 = vpack.c.b16 %v872, %v869
      %v912 = vpack.c.b16 %v873, %v870
      %v913 = vpack.c.b16 %v874, %v871
      %v914 = vpack.c.b16 %v878, %v875
      %v915 = vpack.c.b16 %v879, %v876
      %v916 = vpack.c.b16 %v880, %v877
      %v917 = vpack.c.b16 %v884, %v881
      %v918 = vpack.c.b16 %v885, %v882
      %v919 = vpack.c.b16 %v886, %v883
      %v920 = vpack.c.b16 %v890, %v887
      %v921 = vpack.c.b16 %v891, %v888
      %v922 = vpack.c.b16 %v892, %v889
      %v923 = vpack.c.b16 %v896, %v893
      %v924 = vpack.c.b16 %v897, %v894
      %v925 = vpack.c.b16 %v898, %v895
      %v926 = vpack.c.b16 %v902, %v899
      %v927 = vpack.c.b16 %v903, %v900
      %v928 = vpack.c.b16 %v904, %v901
      %953 = vmatpush.bf16.msra.mxu0 %v926
      %954 = vmatpush.bf16.msra.mxu0 %v923
      %955 = vmatpush.bf16.msra.mxu0 %v920
      %956 = vmatpush.bf16.msra.mxu0 %v917
      %957 = vmatpush.bf16.msra.mxu0 %v914
      %958 = vmatpush.bf16.msra.mxu0 %v911
      %959 = vmatpush.bf16.msra.mxu0 %v908
      %960 = vmatpush.bf16.msra.mxu0 %v905
      %961 = vmatmul.bf16.gmra.mxu0 %v749
      %v962 = vpop.f32.mrf.mxu0
      %v963 = vadd.f32 %v819, %v962
      %v964 = vpop.f32.mrf.mxu0
      %965 = vdwg.mxu0
      %966 = vmatpush.bf16.msra.mxu0 %v927
      %967 = vmatpush.bf16.msra.mxu0 %v924
      %968 = vmatpush.bf16.msra.mxu0 %v921
      %969 = vmatpush.bf16.msra.mxu0 %v918
      %970 = vmatpush.bf16.msra.mxu0 %v915
      %971 = vmatpush.bf16.msra.mxu0 %v912
      %972 = vmatpush.bf16.msra.mxu0 %v909
      %973 = vmatpush.bf16.msra.mxu0 %v906
      %974 = vmatmul.bf16.gmra.mxu0 %v749
      %v975 = vpop.f32.mrf.mxu0
      %v976 = vadd.f32 %v820, %v975
      %v977 = vpop.f32.mrf.mxu0
      %978 = vdwg.mxu0
      %979 = vmatpush.bf16.msra.mxu0 %v928
      %980 = vmatpush.bf16.msra.mxu0 %v925
      %981 = vmatpush.bf16.msra.mxu0 %v922
      %982 = vmatpush.bf16.msra.mxu0 %v919
      %983 = vmatpush.bf16.msra.mxu0 %v916
      %984 = vmatpush.bf16.msra.mxu0 %v913
      %985 = vmatpush.bf16.msra.mxu0 %v910
      %986 = vmatpush.bf16.msra.mxu0 %v907
      %987 = vmatmul.bf16.gmra.mxu0 %v749
      %v988 = vpop.f32.mrf.mxu0
      %v989 = vadd.f32 %v821, %v988
      %v990 = vpop.f32.mrf.mxu0
      %991 = vdwg.mxu0
      %v992 = vpack.c.bf16 %v817, %v817
      %v994 = vperm.slane %v815, 0
      %v995 = vperm.slane %v815, 1
      %v996 = vperm.slane %v815, 2
      %v1032 = vunpack.c.l.b16 %v782
      %v1033 = vunpack.c.h.b16 %v782
      %v1034 = vunpack.c.l.b16 %v783
      %v1035 = vunpack.c.l.b16 %v784
      %v1036 = vunpack.c.h.b16 %v784
      %v1037 = vunpack.c.l.b16 %v785
      %v1038 = vunpack.c.l.b16 %v786
      %v1039 = vunpack.c.h.b16 %v786
      %v1040 = vunpack.c.l.b16 %v787
      %v1041 = vunpack.c.l.b16 %v788
      %v1042 = vunpack.c.h.b16 %v788
      %v1043 = vunpack.c.l.b16 %v789
      %v1044 = vunpack.c.l.b16 %v790
      %v1045 = vunpack.c.h.b16 %v790
      %v1046 = vunpack.c.l.b16 %v791
      %v1047 = vunpack.c.l.b16 %v792
      %v1048 = vunpack.c.h.b16 %v792
      %v1049 = vunpack.c.l.b16 %v793
      %v1050 = vunpack.c.l.b16 %v794
      %v1051 = vunpack.c.h.b16 %v794
      %v1052 = vunpack.c.l.b16 %v795
      %v1053 = vunpack.c.l.b16 %v796
      %v1054 = vunpack.c.h.b16 %v796
      %v1055 = vunpack.c.l.b16 %v797
      %v1056 = vunpack.c.l.b16 %v798
      %v1057 = vunpack.c.h.b16 %v798
      %v1058 = vunpack.c.l.b16 %v799
      %v1059 = vunpack.c.l.b16 %v800
      %v1060 = vunpack.c.h.b16 %v800
      %v1061 = vunpack.c.l.b16 %v801
      %v1062 = vunpack.c.l.b16 %v802
      %v1063 = vunpack.c.h.b16 %v802
      %v1064 = vunpack.c.l.b16 %v803
      %v1065 = vunpack.c.l.b16 %v804
      %v1066 = vunpack.c.h.b16 %v804
      %v1067 = vunpack.c.l.b16 %v805
      %v1068 = vunpack.c.l.b16 %v806
      %v1069 = vunpack.c.h.b16 %v806
      %v1070 = vunpack.c.l.b16 %v807
      %v1071 = vunpack.c.l.b16 %v808
      %v1072 = vunpack.c.h.b16 %v808
      %v1073 = vunpack.c.l.b16 %v809
      %v1074 = vunpack.c.l.b16 %v810
      %v1075 = vunpack.c.h.b16 %v810
      %v1076 = vunpack.c.l.b16 %v811
      %v1077 = vunpack.c.l.b16 %v812
      %v1078 = vunpack.c.h.b16 %v812
      %v1079 = vunpack.c.l.b16 %v813
      %v1080 = vpack.c.b16 %v1035, %v1032
      %v1081 = vpack.c.b16 %v1036, %v1033
      %v1082 = vpack.c.b16 %v1037, %v1034
      %v1083 = vpack.c.b16 %v1041, %v1038
      %v1084 = vpack.c.b16 %v1042, %v1039
      %v1085 = vpack.c.b16 %v1043, %v1040
      %v1086 = vpack.c.b16 %v1047, %v1044
      %v1087 = vpack.c.b16 %v1048, %v1045
      %v1088 = vpack.c.b16 %v1049, %v1046
      %v1089 = vpack.c.b16 %v1053, %v1050
      %v1090 = vpack.c.b16 %v1054, %v1051
      %v1091 = vpack.c.b16 %v1055, %v1052
      %v1092 = vpack.c.b16 %v1059, %v1056
      %v1093 = vpack.c.b16 %v1060, %v1057
      %v1094 = vpack.c.b16 %v1061, %v1058
      %v1095 = vpack.c.b16 %v1065, %v1062
      %v1096 = vpack.c.b16 %v1066, %v1063
      %v1097 = vpack.c.b16 %v1067, %v1064
      %v1098 = vpack.c.b16 %v1071, %v1068
      %v1099 = vpack.c.b16 %v1072, %v1069
      %v1100 = vpack.c.b16 %v1073, %v1070
      %v1101 = vpack.c.b16 %v1077, %v1074
      %v1102 = vpack.c.b16 %v1078, %v1075
      %v1103 = vpack.c.b16 %v1079, %v1076
      %1128 = vmatpush.bf16.msra.mxu0 %v1101
      %1129 = vmatpush.bf16.msra.mxu0 %v1098
      %1130 = vmatpush.bf16.msra.mxu0 %v1095
      %1131 = vmatpush.bf16.msra.mxu0 %v1092
      %1132 = vmatpush.bf16.msra.mxu0 %v1089
      %1133 = vmatpush.bf16.msra.mxu0 %v1086
      %1134 = vmatpush.bf16.msra.mxu0 %v1083
      %1135 = vmatpush.bf16.msra.mxu0 %v1080
      %1136 = vmatmul.bf16.gmra.mxu0 %v992
      %v1137 = vpop.f32.mrf.mxu0
      %v1138 = vadd.f32 %v994, %v1137
      %v1139 = vpop.f32.mrf.mxu0
      %1140 = vdwg.mxu0
      %1141 = vmatpush.bf16.msra.mxu0 %v1102
      %1142 = vmatpush.bf16.msra.mxu0 %v1099
      %1143 = vmatpush.bf16.msra.mxu0 %v1096
      %1144 = vmatpush.bf16.msra.mxu0 %v1093
      %1145 = vmatpush.bf16.msra.mxu0 %v1090
      %1146 = vmatpush.bf16.msra.mxu0 %v1087
      %1147 = vmatpush.bf16.msra.mxu0 %v1084
      %1148 = vmatpush.bf16.msra.mxu0 %v1081
      %1149 = vmatmul.bf16.gmra.mxu0 %v992
      %v1150 = vpop.f32.mrf.mxu0
      %v1151 = vadd.f32 %v995, %v1150
      %v1152 = vpop.f32.mrf.mxu0
      %1153 = vdwg.mxu0
      %1154 = vmatpush.bf16.msra.mxu0 %v1103
      %1155 = vmatpush.bf16.msra.mxu0 %v1100
      %1156 = vmatpush.bf16.msra.mxu0 %v1097
      %1157 = vmatpush.bf16.msra.mxu0 %v1094
      %1158 = vmatpush.bf16.msra.mxu0 %v1091
      %1159 = vmatpush.bf16.msra.mxu0 %v1088
      %1160 = vmatpush.bf16.msra.mxu0 %v1085
      %1161 = vmatpush.bf16.msra.mxu0 %v1082
      %1162 = vmatmul.bf16.gmra.mxu0 %v992
      %v1163 = vpop.f32.mrf.mxu0
      %v1164 = vadd.f32 %v996, %v1163
      %v1165 = vpop.f32.mrf.mxu0
      %1166 = vdwg.mxu0
      %v1167 = vadd.f32 %v963, %v1138
      %v1168 = vxor.u32 %v1167, 2147483648
      %v1169 = vmul.f32 %v1168, 1.442695
      %v1170 = vpow.pop %v1169
      %v1171 = vadd.f32 %v1170, 1.0
      %v1172 = vrcp.pop %v1171
      %v1173 = vmul.f32 %v1171, %v1172
      %v1174 = vsub.f32 1.0, %v1173
      %v1175 = vmul.f32 %v1172, %v1174
      %v1176 = vadd.f32 %v1172, %v1175
      %vm1177 = vweird.f32 %v1171
      %vm1178 = vweird.f32 %v1172
      %vm1179 = vmor %vm1177, %vm1178
      %v1180 = vsel %vm1179, %v1172, %v1176
      %v1181 = vand.u32 2147483647, %v1171
      %vm1182 = vcmp.eq.f32.partialorder %v1181, 8.507059e+37
      %v1183 = vand.u32 %v1171, 2147483648
      %v1184 = vor.u32 1.1754944e-38, %v1183
      %v1185 = vsel %vm1182, %v1184, %v1180
      %v1186 = vmul.f32 1.0, %v1185
      %v1187 = vadd.f32 %v976, %v1151
      %v1188 = vxor.u32 %v1187, 2147483648
      %v1189 = vmul.f32 %v1188, 1.442695
      %v1190 = vpow.pop %v1189
      %v1191 = vadd.f32 %v1190, 1.0
      %v1192 = vrcp.pop %v1191
      %v1193 = vmul.f32 %v1191, %v1192
      %v1194 = vsub.f32 1.0, %v1193
      %v1195 = vmul.f32 %v1192, %v1194
      %v1196 = vadd.f32 %v1192, %v1195
      %vm1197 = vweird.f32 %v1191
      %vm1198 = vweird.f32 %v1192
      %vm1199 = vmor %vm1197, %vm1198
      %v1200 = vsel %vm1199, %v1192, %v1196
      %v1201 = vand.u32 2147483647, %v1191
      %vm1202 = vcmp.eq.f32.partialorder %v1201, 8.507059e+37
      %v1203 = vand.u32 %v1191, 2147483648
      %v1204 = vor.u32 1.1754944e-38, %v1203
      %v1205 = vsel %vm1202, %v1204, %v1200
      %v1206 = vmul.f32 1.0, %v1205
      %v1207 = vmul.f32 %v1186, %v1164
      %v1208 = vadd.f32 %v989, %v1207
      %v1209 = vtanh.pop %v1208
      %v1210 = vsub.f32 1.0, %v1206
      %v1211 = vmul.f32 %v1210, %v1209
      %v1212 = vmul.f32 %v1206, %v817
      %v1213 = vadd.f32 %v1211, %v1212
      %s1214 = scalar_lea.vmem %s14, 8
      %1215 = vst [vmem:[%s1214] sm:$0xff] %v1213
      %v1216 = vpack.c.bf16 %v1213, %v1213
      %1217 = vst [vmem:[#allocation3] sm:$0xf] %v1216
    $region69: #{decoder_forward.1} parent=1 // pred_fallthru
      _
    %v1218 = vld [vmem:[#allocation3] sm:$0xf]
    %v1219 = vld [vmem:[#allocation14] sm:$0xf]
    %v1220 = vld [vmem:[#allocation14 + $0x4] sm:$0xf]
    %v1221 = vld [vmem:[#allocation14 + $0x8] sm:$0xf]
    %v1222 = vld [vmem:[#allocation14 + $0xc] sm:$0xf]
    %v1223 = vld [vmem:[#allocation14 + $0x10] sm:$0xf]
    %v1224 = vld [vmem:[#allocation14 + $0x14] sm:$0xf]
    %v1225 = vld [vmem:[#allocation14 + $0x18] sm:$0xf]
    %v1226 = vld [vmem:[#allocation14 + $0x1c] sm:$0xf]
    %v1227 = vld [vmem:[#allocation14 + $0x20] sm:$0xf]
    %v1228 = vld [vmem:[#allocation14 + $0x24] sm:$0xf]
    %v1229 = vld [vmem:[#allocation14 + $0x28] sm:$0xf]
    %v1230 = vld [vmem:[#allocation14 + $0x2c] sm:$0xf]
    %v1231 = vld [vmem:[#allocation14 + $0x30] sm:$0xf]
    %v1232 = vld [vmem:[#allocation14 + $0x34] sm:$0xf]
    %v1233 = vld [vmem:[#allocation14 + $0x38] sm:$0xf]
    %v1234 = vld [vmem:[#allocation14 + $0x3c] sm:$0xf]
    %v1235 = vld [vmem:[%s12] sm:$0x1]
    %v1237 = vperm.slane %v1235, 0
    %v1255 = vunpack.c.l.b16 %v1219
    %v1256 = vunpack.c.l.b16 %v1220
    %v1257 = vunpack.c.l.b16 %v1221
    %v1258 = vunpack.c.l.b16 %v1222
    %v1259 = vunpack.c.l.b16 %v1223
    %v1260 = vunpack.c.l.b16 %v1224
    %v1261 = vunpack.c.l.b16 %v1225
    %v1262 = vunpack.c.l.b16 %v1226
    %v1263 = vunpack.c.l.b16 %v1227
    %v1264 = vunpack.c.l.b16 %v1228
    %v1265 = vunpack.c.l.b16 %v1229
    %v1266 = vunpack.c.l.b16 %v1230
    %v1267 = vunpack.c.l.b16 %v1231
    %v1268 = vunpack.c.l.b16 %v1232
    %v1269 = vunpack.c.l.b16 %v1233
    %v1270 = vunpack.c.l.b16 %v1234
    %v1271 = vpack.c.b16 %v1256, %v1255
    %v1272 = vpack.c.b16 %v1258, %v1257
    %v1273 = vpack.c.b16 %v1260, %v1259
    %v1274 = vpack.c.b16 %v1262, %v1261
    %v1275 = vpack.c.b16 %v1264, %v1263
    %v1276 = vpack.c.b16 %v1266, %v1265
    %v1277 = vpack.c.b16 %v1268, %v1267
    %v1278 = vpack.c.b16 %v1270, %v1269
    %1287 = vmatpush.bf16.msra.mxu0 %v1278
    %1288 = vmatpush.bf16.msra.mxu0 %v1277
    %1289 = vmatpush.bf16.msra.mxu0 %v1276
    %1290 = vmatpush.bf16.msra.mxu0 %v1275
    %1291 = vmatpush.bf16.msra.mxu0 %v1274
    %1292 = vmatpush.bf16.msra.mxu0 %v1273
    %1293 = vmatpush.bf16.msra.mxu0 %v1272
    %1294 = vmatpush.bf16.msra.mxu0 %v1271
    %1295 = vmatmul.bf16.gmra.mxu0 %v1218
    %v1296 = vpop.f32.mrf.mxu0
    %v1297 = vadd.f32 %v1237, %v1296
    %v1298 = vpop.f32.mrf.mxu0
    %1299 = vdwg.mxu0
    %1300 = vst [vmem:[%s13] sm:$0xff] %v1297
    // Predicated region
    $region102: #{decoder_forward.1} parent=1 // pred_check
      _
    $region103: #{decoder_forward.1} parent=1 // pred_check_branch
      %1302 = sbr.rel (0) target = $region105
    $region104: #{decoder_forward.1} parent=1 // pred_region
      _
    $region105: #{decoder_forward.1} parent=1 // pred_fallthru
      _
    // Predicated region
    $region106: #{decoder_forward.1} parent=1 // pred_check
      _
    $region107: #{decoder_forward.1} parent=1 // pred_check_branch
      %1304 = sbr.rel (0) target = $region109
    $region108: #{decoder_forward.1} parent=1 // pred_region
      _
    $region109: #{decoder_forward.1} parent=1 // pred_fallthru
      _
    // Predicated region
    $region110: #{decoder_forward.1} parent=1 // pred_check
      _
    $region111: #{decoder_forward.1} parent=1 // pred_check_branch
      %1306 = sbr.rel (0) target = $region113
    $region112: #{decoder_forward.1} parent=1 // pred_region
      _
    $region113: #{decoder_forward.1} parent=1 // pred_fallthru
      _
    // Predicated region
    $region114: #{decoder_forward.1} parent=1 // pred_check
      _
    $region115: #{decoder_forward.1} parent=1 // pred_check_branch
      %1308 = sbr.rel (0) target = $region117
    $region116: #{decoder_forward.1} parent=1 // pred_region
      _
    $region117: #{decoder_forward.1} parent=1 // pred_fallthru
      _
    %1309 = vsyncpa [#allocation8], 1
    %1310 = vsyncpa [#allocation10], 1
    %1311 = vsyncpa [#allocation13], 1
  %1312 = vsyncmov [#allocation4]
  %s1313 = vpop.sfrf %1312
  %p1314 = scmp.eq.s32.totalorder %s1313, 0
  %p1315 = pneg %p1314
  %1317 = shalt.err (%p1315)
  %s1318 = scalar_lea.sflag [#allocation4], 1
  %1319 = vsyncmov %s1318
  %s1320 = vpop.sfrf %1319
  %p1321 = scmp.eq.s32.totalorder %s1320, 0
  %p1322 = pneg %p1321
  %1324 = shalt.err (%p1322)
  %s1325 = scalar_lea.sflag [#allocation4], 2
  %1326 = vsyncmov %s1325
  %s1327 = vpop.sfrf %1326
  %p1328 = scmp.eq.s32.totalorder %s1327, 0
  %p1329 = pneg %p1328
  %1331 = shalt.err (%p1329)
  %s1332 = scalar_lea.sflag [#allocation4], 3
  %1333 = vsyncmov %s1332
  %s1334 = vpop.sfrf %1333
  %p1335 = scmp.eq.s32.totalorder %s1334, 0
  %p1336 = pneg %p1335
  %1338 = shalt.err (%p1336)
  %s1339 = scalar_lea.sflag [#allocation4], 4
  %1340 = vsyncmov %s1339
  %s1341 = vpop.sfrf %1340
  %p1342 = scmp.eq.s32.totalorder %s1341, 0
  %p1343 = pneg %p1342
  %1345 = shalt.err (%p1343)
  %s1346 = scalar_lea.sflag [#allocation4], 5
  %1347 = vsyncmov %s1346
  %s1348 = vpop.sfrf %1347
  %p1349 = scmp.eq.s32.totalorder %s1348, 0
  %p1350 = pneg %p1349
  %1352 = shalt.err (%p1350)
  %s1353 = scalar_lea.sflag [#allocation4], 6
  %1354 = vsyncmov %s1353
  %s1355 = vpop.sfrf %1354
  %p1356 = scmp.eq.s32.totalorder %s1355, 0
  %p1357 = pneg %p1356
  %1359 = shalt.err (%p1357)
  %s1360 = scalar_lea.sflag [#allocation4], 7
  %1361 = vsyncmov %s1360
  %s1362 = vpop.sfrf %1361
  %p1363 = scmp.eq.s32.totalorder %s1362, 0
  %p1364 = pneg %p1363
  %1366 = shalt.err (%p1364)

</llo_original>
